<compile_context>
chip_gen: v6e
topology: v6e:2x2x1
jax: 0.10.0
libtpu: 0.0.40
codegen_flags: <defaults>
</compile_context>

<pallas_src>
import functools
import numpy as np
import jax
import jax.numpy as jnp
from jax import lax
from jax.experimental import pallas as pl
from jax.experimental.pallas import tpu as pltpu

BN_EPS = 1e-5
_UNROLL_MAX_T = 16   # beyond this, use lax.fori_loop instead of a full Python unroll


def _gate_block_lanes(H):
    # lanes reserved per gate: pack 4 gates into one 128-lane block when H allows it
    if H <= 32:
        return 32
    if H <= 64:
        return 64
    return ((H + 127) // 128) * 128


def _lstm_bn_kernel(x_ref, gamma_ref, beta_ref, s_ref,
                    wih0_ref, whh0_ref, b0_ref,
                    wih1_ref, whh1_ref, b1_ref,
                    out_ref, *, T, B_real, BP, H, HL):
    G = 4 * HL

    # ---- BatchNorm1d (train-mode batch stats), single pass: var = E[x^2] - mean^2 ----
    # Padded batch rows are exactly zero, so dividing the padded-slab sums by the REAL
    # row count (T * B_real) reproduces the statistics of the unpadded batch.
    x = x_ref[...]                                                  # (T*BP, C) f32
    inv_n = 1.0 / float(T * B_real)
    mean = jnp.sum(x, axis=0, keepdims=True) * inv_n                # (1, C)
    ex2 = jnp.sum(x * x, axis=0, keepdims=True) * inv_n             # (1, C)
    var = ex2 - mean * mean
    scale = lax.rsqrt(var + BN_EPS) * gamma_ref[...]                # (1, C)
    shift = beta_ref[...] - mean * scale                            # (1, C)
    xn = x * scale + shift                                          # one-time, off the recurrence
    # (For T*B >> C, fold scale/shift into wih0/b0 instead; negligible at these sizes.)

    # ---- hoisted layer-0 input projection for every timestep at once (bf16 MXU) ----
    zx0 = jnp.dot(xn.astype(jnp.bfloat16), wih0_ref[...],
                  preferred_element_type=jnp.float32) + b0_ref[...]  # (T*BP, G) f32
    zx0_r = zx0.reshape(T, BP, G)        # BP is a sublane-tile multiple -> clean re-view

    whh0 = whh0_ref[...]                 # (H, G) bf16
    wih1 = wih1_ref[...]                 # (H, G) bf16
    whh1 = whh1_ref[...]                 # (H, G) bf16
    b1 = b1_ref[...]                     # (1, G) f32

    # lengths broadcast hoisted out of the loop; padded batch rows have length 0
    len_b = jnp.broadcast_to(s_ref[...], (BP, H))                   # (BP, H) int32

    def split_gates(z):
        # packed gates: gate k lives at lanes [k*HL, k*HL + H); one sigmoid + one tanh
        # over the full (BP, G) block, then static lane slices (relayout, off the EUP).
        sg = jax.nn.sigmoid(z)
        th = jnp.tanh(z)
        i = sg[:, 0 * HL:0 * HL + H]
        f = sg[:, 1 * HL:1 * HL + H]
        g = th[:, 2 * HL:2 * HL + H]
        o = sg[:, 3 * HL:3 * HL + H]
        return i, f, g, o

    def step(t, carry):
        h0, c0, h1, c1 = carry
        mask = len_b > t                 # pack_padded_sequence: update iff t < s[b]

        # layer 0 — only the recurrent matmul remains on the per-step chain
        z0 = zx0_r[t] + jnp.dot(h0.astype(jnp.bfloat16), whh0,
                                preferred_element_type=jnp.float32)
        i0, f0, g0, o0 = split_gates(z0)
        c0n = f0 * c0 + i0 * g0
        h0n = o0 * jnp.tanh(c0n)
        h0 = jnp.where(mask, h0n, h0)
        c0 = jnp.where(mask, c0n, c0)

        # layer 1 — two back-to-back MXU dots, no per-step concatenate
        # TODO(synk): inter-layer dropout (p=0.2) is train-mode; eval semantics here.
        z1 = (jnp.dot(h0n.astype(jnp.bfloat16), wih1, preferred_element_type=jnp.float32)
              + jnp.dot(h1.astype(jnp.bfloat16), whh1, preferred_element_type=jnp.float32)
              + b1)
        i1, f1, g1, o1 = split_gates(z1)
        c1n = f1 * c1 + i1 * g1
        h1n = o1 * jnp.tanh(c1n)
        h1 = jnp.where(mask, h1n, h1)
        c1 = jnp.where(mask, c1n, c1)
        return h0, c0, h1, c1

    zero = jnp.zeros((BP, H), jnp.float32)
    carry = (zero, zero, zero, zero)     # vreg-resident carries, no VMEM round-trips
    if T <= _UNROLL_MAX_T:
        for t in range(T):               # full unroll: layer-0 step t+1 overlaps layer-1 step t
            carry = step(t, carry)
    else:
        carry = lax.fori_loop(0, T, step, carry)   # bounded live ranges for long sequences

    out_ref[...] = carry[2]              # final layer-2 hidden (BP, H) == ht[-1]


def lstm_textnw_forward(x, s, params):
    """x: (B, C, T) float32, s: (B,) int lengths. Returns (B, H) float32 == ht[-1]."""
    B, C, T = x.shape
    H = params["whh0"].shape[1]          # hidden size (W_hh is (4H, H))
    HL = _gate_block_lanes(H)
    G = 4 * HL
    BP = ((B + 7) // 8) * 8              # pad batch to the 8-sublane f32 tile

    xt = jnp.transpose(x, (2, 0, 1)).astype(jnp.float32)            # (T, B, C) time-major
    xt = jnp.pad(xt, ((0, 0), (0, BP - B), (0, 0)))                 # zero rows -> BN stats intact
    x_flat = xt.reshape(T * BP, C)
    s2 = jnp.pad(s.astype(jnp.int32), (0, BP - B)).reshape(BP, 1)   # padded rows: length 0
    gamma = params["gamma"].reshape(1, C).astype(jnp.float32)
    beta = params["beta"].reshape(1, C).astype(jnp.float32)

    def pack_gate_cols(wT, dtype):       # (K, 4H) -> (K, G): gate k at lanes [k*HL, k*HL+H)
        out = jnp.zeros((wT.shape[0], G), jnp.float32)
        for k in range(4):
            out = out.at[:, k * HL:k * HL + H].set(wT[:, k * H:(k + 1) * H])
        return out.astype(dtype)

    wih0 = pack_gate_cols(params["wih0"].T.astype(jnp.float32), jnp.bfloat16)   # (C, G)
    whh0 = pack_gate_cols(params["whh0"].T.astype(jnp.float32), jnp.bfloat16)   # (H, G)
    wih1 = pack_gate_cols(params["wih1"].T.astype(jnp.float32), jnp.bfloat16)   # (H, G)
    whh1 = pack_gate_cols(params["whh1"].T.astype(jnp.float32), jnp.bfloat16)   # (H, G)
    b0 = pack_gate_cols((params["bih0"] + params["bhh0"])
                        .reshape(1, 4 * H).astype(jnp.float32), jnp.float32)    # (1, G)
    b1 = pack_gate_cols((params["bih1"] + params["bhh1"])
                        .reshape(1, 4 * H).astype(jnp.float32), jnp.float32)    # (1, G)

    grid_spec = pltpu.PrefetchScalarGridSpec(
        num_scalar_prefetch=0,
        grid=(1,),
        in_specs=[
            pl.BlockSpec((T * BP, C), lambda i: (0, 0)),   # x (time-major, batch-padded, flat)
            pl.BlockSpec((1, C), lambda i: (0, 0)),        # gamma
            pl.BlockSpec((1, C), lambda i: (0, 0)),        # beta
            pl.BlockSpec((BP, 1), lambda i: (0, 0)),       # lengths (padded rows = 0)
            pl.BlockSpec((C, G), lambda i: (0, 0)),        # W_ih layer 0 (bf16, gate-packed)
            pl.BlockSpec((H, G), lambda i: (0, 0)),        # W_hh layer 0 (bf16)
            pl.BlockSpec((1, G), lambda i: (0, 0)),        # bias layer 0
            pl.BlockSpec((H, G), lambda i: (0, 0)),        # W_ih layer 1 (bf16)
            pl.BlockSpec((H, G), lambda i: (0, 0)),        # W_hh layer 1 (bf16)
            pl.BlockSpec((1, G), lambda i: (0, 0)),        # bias layer 1
        ],
        out_specs=pl.BlockSpec((BP, H), lambda i: (0, 0)),
    )

    kernel = functools.partial(_lstm_bn_kernel, T=T, B_real=B, BP=BP, H=H, HL=HL)
    out = pl.pallas_call(
        kernel,
        out_shape=jax.ShapeDtypeStruct((BP, H), jnp.float32),
        grid_spec=grid_spec,
        compiler_params=pltpu.CompilerParams(dimension_semantics=("arbitrary",)),
    )(x_flat, gamma, beta, s2, wih0, whh0, b0, wih1, whh1, b1)
    return out[:B, :]


def _ref_forward(x, s, p):
    """Pure-JAX reference of the PyTorch forward (BN train-mode + 2-layer LSTM, ht[-1])."""
    B, C, T = x.shape
    H = p["whh0"].shape[1]
    hi = jax.lax.Precision.HIGHEST

    mean = jnp.mean(x, axis=(0, 2), keepdims=True)
    var = jnp.mean(jnp.square(x - mean), axis=(0, 2), keepdims=True)
    xn = (x - mean) / jnp.sqrt(var + BN_EPS)
    xn = xn * p["gamma"][None, :, None] + p["beta"][None, :, None]
    xt = jnp.transpose(xn, (2, 0, 1))                               # (T, B, C)

    def layer(inp, wih, whh, bih, bhh):
        def step(carry, x_t):
            h, c = carry
            z = (jnp.dot(x_t, wih.T, precision=hi)
                 + jnp.dot(h, whh.T, precision=hi) + bih + bhh)
            i, f, g, o = jnp.split(z, 4, axis=-1)
            c = jax.nn.sigmoid(f) * c + jax.nn.sigmoid(i) * jnp.tanh(g)
            h = jax.nn.sigmoid(o) * jnp.tanh(c)
            return (h, c), h
        init = (jnp.zeros((B, H), jnp.float32), jnp.zeros((B, H), jnp.float32))
        _, hs = jax.lax.scan(step, init, inp)
        return hs                                                   # (T, B, H)

    hs0 = layer(xt, p["wih0"], p["whh0"], p["bih0"], p["bhh0"])
    hs1 = layer(hs0, p["wih1"], p["whh1"], p["bih1"], p["bhh1"])
    return hs1[s - 1, jnp.arange(B)]                                # (B, H)


def _init_params(key, inp_size, hidden):
    stdv = 1.0 / np.sqrt(hidden)
    ks = jax.random.split(key, 8)
    u = lambda k, shape: jax.random.uniform(k, shape, jnp.float32, -stdv, stdv)
    return {
        "gamma": jnp.ones((inp_size,), jnp.float32),
        "beta": jnp.zeros((inp_size,), jnp.float32),
        "wih0": u(ks[0], (4 * hidden, inp_size)),
        "whh0": u(ks[1], (4 * hidden, hidden)),
        "bih0": u(ks[2], (4 * hidden,)),
        "bhh0": u(ks[3], (4 * hidden,)),
        "wih1": u(ks[4], (4 * hidden, hidden)),
        "whh1": u(ks[5], (4 * hidden, hidden)),
        "bih1": u(ks[6], (4 * hidden,)),
        "bhh1": u(ks[7], (4 * hidden,)),
    }


if __name__ == "__main__":
    B, C, T, H = 4, 64, 8, 32   # batch, inp_size, max seq len, lstm_size

    key = jax.random.PRNGKey(0)
    kx, kp = jax.random.split(key)
    x = jax.random.normal(kx, (B, C, T), jnp.float32)
    s = jnp.array([8, 5, 7, 2], jnp.int32)           # true sequence lengths (<= T)
    params = _init_params(kp, C, H)

    out = jax.block_until_ready(lstm_textnw_forward(x, s, params))
    ref = jax.block_until_ready(_ref_forward(x, s, params))

    # bf16 MXU operands vs. an f32/HIGHEST reference: expected abs error ~1e-2 worst case.
    np.testing.assert_allclose(np.asarray(out), np.asarray(ref), rtol=2e-2, atol=2e-2)

    print("KERNEL_OK")
</pallas_src>

<mosaic_0001>
module attributes {stable_mosaic.version = 11 : i64} {
  func.func @_lstm_bn_kernel(%arg0: i32, %arg1: memref<64x64xf32, #tpu.memory_space<vmem>>, %arg2: memref<1x64xf32, #tpu.memory_space<vmem>>, %arg3: memref<1x64xf32, #tpu.memory_space<vmem>>, %arg4: memref<8x1xi32, #tpu.memory_space<vmem>>, %arg5: memref<64x128xbf16, #tpu.memory_space<vmem>>, %arg6: memref<32x128xbf16, #tpu.memory_space<vmem>>, %arg7: memref<1x128xf32, #tpu.memory_space<vmem>>, %arg8: memref<32x128xbf16, #tpu.memory_space<vmem>>, %arg9: memref<32x128xbf16, #tpu.memory_space<vmem>>, %arg10: memref<1x128xf32, #tpu.memory_space<vmem>>, %arg11: memref<8x32xf32, #tpu.memory_space<vmem>>) attributes {dimension_semantics = [#tpu.dimension_semantics<arbitrary>], iteration_bounds = array<i64: 1>, scalar_prefetch = 0 : i64, scratch_operands = 0 : i64, tpu.core_type = #tpu.core_type<tc>, window_params = [{pipeline_mode = #tpu.pipeline_mode<synchronous>, transform_indices = @transform_0, window_bounds = array<i64: 64, 64>}, {pipeline_mode = #tpu.pipeline_mode<synchronous>, transform_indices = @transform_1, window_bounds = array<i64: 1, 64>}, {pipeline_mode = #tpu.pipeline_mode<synchronous>, transform_indices = @transform_2, window_bounds = array<i64: 1, 64>}, {pipeline_mode = #tpu.pipeline_mode<synchronous>, transform_indices = @transform_3, window_bounds = array<i64: 8, 1>}, {pipeline_mode = #tpu.pipeline_mode<synchronous>, transform_indices = @transform_4, window_bounds = array<i64: 64, 128>}, {pipeline_mode = #tpu.pipeline_mode<synchronous>, transform_indices = @transform_5, window_bounds = array<i64: 32, 128>}, {pipeline_mode = #tpu.pipeline_mode<synchronous>, transform_indices = @transform_6, window_bounds = array<i64: 1, 128>}, {pipeline_mode = #tpu.pipeline_mode<synchronous>, transform_indices = @transform_7, window_bounds = array<i64: 32, 128>}, {pipeline_mode = #tpu.pipeline_mode<synchronous>, transform_indices = @transform_8, window_bounds = array<i64: 32, 128>}, {pipeline_mode = #tpu.pipeline_mode<synchronous>, transform_indices = @transform_9, window_bounds = array<i64: 1, 128>}, {pipeline_mode = #tpu.pipeline_mode<synchronous>, transform_indices = @transform_10, window_bounds = array<i64: 8, 32>}]} {
    %c0 = arith.constant 0 : index
    %c0_0 = arith.constant 0 : index
    %0 = vector.load %arg1[%c0, %c0_0] : memref<64x64xf32, #tpu.memory_space<vmem>>, vector<64x64xf32>
    %cst = arith.constant dense<0.000000e+00> : vector<64xf32>
    %1 = vector.multi_reduction <add>, %0, %cst [0] : vector<64x64xf32> to vector<64xf32>
    %2 = vector.shape_cast %1 : vector<64xf32> to vector<1x64xf32>
    %cst_1 = arith.constant 3.125000e-02 : f32
    %3 = vector.broadcast %cst_1 : f32 to vector<1x64xf32>
    %4 = arith.mulf %2, %3 : vector<1x64xf32>
    %5 = arith.mulf %0, %0 : vector<64x64xf32>
    %cst_2 = arith.constant dense<0.000000e+00> : vector<64xf32>
    %6 = vector.multi_reduction <add>, %5, %cst_2 [0] : vector<64x64xf32> to vector<64xf32>
    %7 = vector.shape_cast %6 : vector<64xf32> to vector<1x64xf32>
    %cst_3 = arith.constant 3.125000e-02 : f32
    %8 = vector.broadcast %cst_3 : f32 to vector<1x64xf32>
    %9 = arith.mulf %7, %8 : vector<1x64xf32>
    %10 = arith.mulf %4, %4 : vector<1x64xf32>
    %11 = arith.subf %9, %10 : vector<1x64xf32>
    %cst_4 = arith.constant 9.99999974E-6 : f32
    %12 = vector.broadcast %cst_4 : f32 to vector<1x64xf32>
    %13 = arith.addf %11, %12 : vector<1x64xf32>
    %14 = math.rsqrt %13 : vector<1x64xf32>
    %c0_5 = arith.constant 0 : index
    %c0_6 = arith.constant 0 : index
    %15 = vector.load %arg2[%c0_5, %c0_6] : memref<1x64xf32, #tpu.memory_space<vmem>>, vector<1x64xf32>
    %16 = arith.mulf %14, %15 : vector<1x64xf32>
    %c0_7 = arith.constant 0 : index
    %c0_8 = arith.constant 0 : index
    %17 = vector.load %arg3[%c0_7, %c0_8] : memref<1x64xf32, #tpu.memory_space<vmem>>, vector<1x64xf32>
    %18 = arith.mulf %4, %16 : vector<1x64xf32>
    %19 = arith.subf %17, %18 : vector<1x64xf32>
    %20 = vector.broadcast %16 : vector<1x64xf32> to vector<64x64xf32>
    %21 = arith.mulf %0, %20 : vector<64x64xf32>
    %22 = vector.broadcast %19 : vector<1x64xf32> to vector<64x64xf32>
    %23 = arith.addf %21, %22 : vector<64x64xf32>
    %24 = arith.truncf %23 : vector<64x64xf32> to vector<64x64xbf16>
    %c0_9 = arith.constant 0 : index
    %c0_10 = arith.constant 0 : index
    %25 = vector.load %arg5[%c0_9, %c0_10] : memref<64x128xbf16, #tpu.memory_space<vmem>>, vector<64x128xbf16>
    %cst_11 = arith.constant dense<0.000000e+00> : vector<64x128xf32>
    %26 = tpu.matmul %24, %25, %cst_11 {dimension_numbers = #tpu.dot_dimension_numbers<[1], [0], [0], [1], [0, 0, 1, 1], [], []>} : vector<64x64xbf16>, vector<64x128xbf16>, vector<64x128xf32> -> vector<64x128xf32>
    %c0_12 = arith.constant 0 : index
    %c0_13 = arith.constant 0 : index
    %27 = vector.load %arg7[%c0_12, %c0_13] : memref<1x128xf32, #tpu.memory_space<vmem>>, vector<1x128xf32>
    %28 = vector.broadcast %27 : vector<1x128xf32> to vector<64x128xf32>
    %29 = arith.addf %26, %28 : vector<64x128xf32>
    %30 = vector.shape_cast %29 : vector<64x128xf32> to vector<8x8x128xf32>
    %c0_14 = arith.constant 0 : index
    %c0_15 = arith.constant 0 : index
    %31 = vector.load %arg6[%c0_14, %c0_15] : memref<32x128xbf16, #tpu.memory_space<vmem>>, vector<32x128xbf16>
    %c0_16 = arith.constant 0 : index
    %c0_17 = arith.constant 0 : index
    %32 = vector.load %arg8[%c0_16, %c0_17] : memref<32x128xbf16, #tpu.memory_space<vmem>>, vector<32x128xbf16>
    %c0_18 = arith.constant 0 : index
    %c0_19 = arith.constant 0 : index
    %33 = vector.load %arg9[%c0_18, %c0_19] : memref<32x128xbf16, #tpu.memory_space<vmem>>, vector<32x128xbf16>
    %c0_20 = arith.constant 0 : index
    %c0_21 = arith.constant 0 : index
    %34 = vector.load %arg10[%c0_20, %c0_21] : memref<1x128xf32, #tpu.memory_space<vmem>>, vector<1x128xf32>
    %c0_22 = arith.constant 0 : index
    %c0_23 = arith.constant 0 : index
    %35 = vector.load %arg4[%c0_22, %c0_23] : memref<8x1xi32, #tpu.memory_space<vmem>>, vector<8x1xi32>
    %36 = vector.shape_cast %35 : vector<8x1xi32> to vector<8x1xi32>
    %37 = vector.broadcast %36 : vector<8x1xi32> to vector<8x32xi32>
    %cst_24 = arith.constant 0.000000e+00 : f32
    %38 = vector.broadcast %cst_24 : f32 to vector<8x32xf32>
    %c0_i32 = arith.constant 0 : i32
    %39 = vector.broadcast %c0_i32 : i32 to vector<8x32xi32>
    %40 = arith.cmpi sgt, %37, %39 : vector<8x32xi32>
    %41 = vector.extract_strided_slice %30 {offsets = [0, 0, 0], sizes = [1, 8, 128], strides = [1, 1, 1]} : vector<8x8x128xf32> to vector<1x8x128xf32>
    %42 = vector.shape_cast %41 : vector<1x8x128xf32> to vector<8x128xf32>
    %43 = arith.truncf %38 : vector<8x32xf32> to vector<8x32xbf16>
    %cst_25 = arith.constant dense<0.000000e+00> : vector<8x128xf32>
    %44 = tpu.matmul %43, %31, %cst_25 {dimension_numbers = #tpu.dot_dimension_numbers<[1], [0], [0], [1], [0, 0, 1, 1], [], []>} : vector<8x32xbf16>, vector<32x128xbf16>, vector<8x128xf32> -> vector<8x128xf32>
    %45 = arith.addf %42, %44 : vector<8x128xf32>
    %46 = arith.negf %45 : vector<8x128xf32>
    %47 = math.exp %46 : vector<8x128xf32>
    %cst_26 = arith.constant 1.000000e+00 : f32
    %48 = vector.broadcast %cst_26 : f32 to vector<8x128xf32>
    %49 = arith.addf %48, %47 : vector<8x128xf32>
    %50 = arith.divf %48, %49 : vector<8x128xf32>
    %51 = math.tanh %45 : vector<8x128xf32>
    %52 = vector.extract_strided_slice %50 {offsets = [0, 0], sizes = [8, 32], strides = [1, 1]} : vector<8x128xf32> to vector<8x32xf32>
    %53 = vector.extract_strided_slice %50 {offsets = [0, 32], sizes = [8, 32], strides = [1, 1]} : vector<8x128xf32> to vector<8x32xf32>
    %54 = vector.extract_strided_slice %51 {offsets = [0, 64], sizes = [8, 32], strides = [1, 1]} : vector<8x128xf32> to vector<8x32xf32>
    %55 = vector.extract_strided_slice %50 {offsets = [0, 96], sizes = [8, 32], strides = [1, 1]} : vector<8x128xf32> to vector<8x32xf32>
    %56 = arith.mulf %53, %38 : vector<8x32xf32>
    %57 = arith.mulf %52, %54 : vector<8x32xf32>
    %58 = arith.addf %56, %57 : vector<8x32xf32>
    %59 = math.tanh %58 : vector<8x32xf32>
    %60 = arith.mulf %55, %59 : vector<8x32xf32>
    %61 = arith.select %40, %60, %38 : vector<8x32xi1>, vector<8x32xf32>
    %62 = arith.select %40, %58, %38 : vector<8x32xi1>, vector<8x32xf32>
    %63 = arith.truncf %60 : vector<8x32xf32> to vector<8x32xbf16>
    %cst_27 = arith.constant dense<0.000000e+00> : vector<8x128xf32>
    %64 = tpu.matmul %63, %32, %cst_27 {dimension_numbers = #tpu.dot_dimension_numbers<[1], [0], [0], [1], [0, 0, 1, 1], [], []>} : vector<8x32xbf16>, vector<32x128xbf16>, vector<8x128xf32> -> vector<8x128xf32>
    %65 = arith.truncf %38 : vector<8x32xf32> to vector<8x32xbf16>
    %cst_28 = arith.constant dense<0.000000e+00> : vector<8x128xf32>
    %66 = tpu.matmul %65, %33, %cst_28 {dimension_numbers = #tpu.dot_dimension_numbers<[1], [0], [0], [1], [0, 0, 1, 1], [], []>} : vector<8x32xbf16>, vector<32x128xbf16>, vector<8x128xf32> -> vector<8x128xf32>
    %67 = arith.addf %64, %66 : vector<8x128xf32>
    %68 = vector.broadcast %34 : vector<1x128xf32> to vector<8x128xf32>
    %69 = arith.addf %67, %68 : vector<8x128xf32>
    %70 = arith.negf %69 : vector<8x128xf32>
    %71 = math.exp %70 : vector<8x128xf32>
    %cst_29 = arith.constant 1.000000e+00 : f32
    %72 = vector.broadcast %cst_29 : f32 to vector<8x128xf32>
    %73 = arith.addf %72, %71 : vector<8x128xf32>
    %74 = arith.divf %72, %73 : vector<8x128xf32>
    %75 = math.tanh %69 : vector<8x128xf32>
    %76 = vector.extract_strided_slice %74 {offsets = [0, 0], sizes = [8, 32], strides = [1, 1]} : vector<8x128xf32> to vector<8x32xf32>
    %77 = vector.extract_strided_slice %74 {offsets = [0, 32], sizes = [8, 32], strides = [1, 1]} : vector<8x128xf32> to vector<8x32xf32>
    %78 = vector.extract_strided_slice %75 {offsets = [0, 64], sizes = [8, 32], strides = [1, 1]} : vector<8x128xf32> to vector<8x32xf32>
    %79 = vector.extract_strided_slice %74 {offsets = [0, 96], sizes = [8, 32], strides = [1, 1]} : vector<8x128xf32> to vector<8x32xf32>
    %80 = arith.mulf %77, %38 : vector<8x32xf32>
    %81 = arith.mulf %76, %78 : vector<8x32xf32>
    %82 = arith.addf %80, %81 : vector<8x32xf32>
    %83 = math.tanh %82 : vector<8x32xf32>
    %84 = arith.mulf %79, %83 : vector<8x32xf32>
    %85 = arith.select %40, %84, %38 : vector<8x32xi1>, vector<8x32xf32>
    %86 = arith.select %40, %82, %38 : vector<8x32xi1>, vector<8x32xf32>
    %c1_i32 = arith.constant 1 : i32
    %87 = vector.broadcast %c1_i32 : i32 to vector<8x32xi32>
    %88 = arith.cmpi sgt, %37, %87 : vector<8x32xi32>
    %89 = vector.extract_strided_slice %30 {offsets = [1, 0, 0], sizes = [1, 8, 128], strides = [1, 1, 1]} : vector<8x8x128xf32> to vector<1x8x128xf32>
    %90 = vector.shape_cast %89 : vector<1x8x128xf32> to vector<8x128xf32>
    %91 = arith.truncf %61 : vector<8x32xf32> to vector<8x32xbf16>
    %cst_30 = arith.constant dense<0.000000e+00> : vector<8x128xf32>
    %92 = tpu.matmul %91, %31, %cst_30 {dimension_numbers = #tpu.dot_dimension_numbers<[1], [0], [0], [1], [0, 0, 1, 1], [], []>} : vector<8x32xbf16>, vector<32x128xbf16>, vector<8x128xf32> -> vector<8x128xf32>
    %93 = arith.addf %90, %92 : vector<8x128xf32>
    %94 = arith.negf %93 : vector<8x128xf32>
    %95 = math.exp %94 : vector<8x128xf32>
    %cst_31 = arith.constant 1.000000e+00 : f32
    %96 = vector.broadcast %cst_31 : f32 to vector<8x128xf32>
    %97 = arith.addf %96, %95 : vector<8x128xf32>
    %98 = arith.divf %96, %97 : vector<8x128xf32>
    %99 = math.tanh %93 : vector<8x128xf32>
    %100 = vector.extract_strided_slice %98 {offsets = [0, 0], sizes = [8, 32], strides = [1, 1]} : vector<8x128xf32> to vector<8x32xf32>
    %101 = vector.extract_strided_slice %98 {offsets = [0, 32], sizes = [8, 32], strides = [1, 1]} : vector<8x128xf32> to vector<8x32xf32>
    %102 = vector.extract_strided_slice %99 {offsets = [0, 64], sizes = [8, 32], strides = [1, 1]} : vector<8x128xf32> to vector<8x32xf32>
    %103 = vector.extract_strided_slice %98 {offsets = [0, 96], sizes = [8, 32], strides = [1, 1]} : vector<8x128xf32> to vector<8x32xf32>
    %104 = arith.mulf %101, %62 : vector<8x32xf32>
    %105 = arith.mulf %100, %102 : vector<8x32xf32>
    %106 = arith.addf %104, %105 : vector<8x32xf32>
    %107 = math.tanh %106 : vector<8x32xf32>
    %108 = arith.mulf %103, %107 : vector<8x32xf32>
    %109 = arith.select %88, %108, %61 : vector<8x32xi1>, vector<8x32xf32>
    %110 = arith.select %88, %106, %62 : vector<8x32xi1>, vector<8x32xf32>
    %111 = arith.truncf %108 : vector<8x32xf32> to vector<8x32xbf16>
    %cst_32 = arith.constant dense<0.000000e+00> : vector<8x128xf32>
    %112 = tpu.matmul %111, %32, %cst_32 {dimension_numbers = #tpu.dot_dimension_numbers<[1], [0], [0], [1], [0, 0, 1, 1], [], []>} : vector<8x32xbf16>, vector<32x128xbf16>, vector<8x128xf32> -> vector<8x128xf32>
    %113 = arith.truncf %85 : vector<8x32xf32> to vector<8x32xbf16>
    %cst_33 = arith.constant dense<0.000000e+00> : vector<8x128xf32>
    %114 = tpu.matmul %113, %33, %cst_33 {dimension_numbers = #tpu.dot_dimension_numbers<[1], [0], [0], [1], [0, 0, 1, 1], [], []>} : vector<8x32xbf16>, vector<32x128xbf16>, vector<8x128xf32> -> vector<8x128xf32>
    %115 = arith.addf %112, %114 : vector<8x128xf32>
    %116 = vector.broadcast %34 : vector<1x128xf32> to vector<8x128xf32>
    %117 = arith.addf %115, %116 : vector<8x128xf32>
    %118 = arith.negf %117 : vector<8x128xf32>
    %119 = math.exp %118 : vector<8x128xf32>
    %cst_34 = arith.constant 1.000000e+00 : f32
    %120 = vector.broadcast %cst_34 : f32 to vector<8x128xf32>
    %121 = arith.addf %120, %119 : vector<8x128xf32>
    %122 = arith.divf %120, %121 : vector<8x128xf32>
    %123 = math.tanh %117 : vector<8x128xf32>
    %124 = vector.extract_strided_slice %122 {offsets = [0, 0], sizes = [8, 32], strides = [1, 1]} : vector<8x128xf32> to vector<8x32xf32>
    %125 = vector.extract_strided_slice %122 {offsets = [0, 32], sizes = [8, 32], strides = [1, 1]} : vector<8x128xf32> to vector<8x32xf32>
    %126 = vector.extract_strided_slice %123 {offsets = [0, 64], sizes = [8, 32], strides = [1, 1]} : vector<8x128xf32> to vector<8x32xf32>
    %127 = vector.extract_strided_slice %122 {offsets = [0, 96], sizes = [8, 32], strides = [1, 1]} : vector<8x128xf32> to vector<8x32xf32>
    %128 = arith.mulf %125, %86 : vector<8x32xf32>
    %129 = arith.mulf %124, %126 : vector<8x32xf32>
    %130 = arith.addf %128, %129 : vector<8x32xf32>
    %131 = math.tanh %130 : vector<8x32xf32>
    %132 = arith.mulf %127, %131 : vector<8x32xf32>
    %133 = arith.select %88, %132, %85 : vector<8x32xi1>, vector<8x32xf32>
    %134 = arith.select %88, %130, %86 : vector<8x32xi1>, vector<8x32xf32>
    %c2_i32 = arith.constant 2 : i32
    %135 = vector.broadcast %c2_i32 : i32 to vector<8x32xi32>
    %136 = arith.cmpi sgt, %37, %135 : vector<8x32xi32>
    %137 = vector.extract_strided_slice %30 {offsets = [2, 0, 0], sizes = [1, 8, 128], strides = [1, 1, 1]} : vector<8x8x128xf32> to vector<1x8x128xf32>
    %138 = vector.shape_cast %137 : vector<1x8x128xf32> to vector<8x128xf32>
    %139 = arith.truncf %109 : vector<8x32xf32> to vector<8x32xbf16>
    %cst_35 = arith.constant dense<0.000000e+00> : vector<8x128xf32>
    %140 = tpu.matmul %139, %31, %cst_35 {dimension_numbers = #tpu.dot_dimension_numbers<[1], [0], [0], [1], [0, 0, 1, 1], [], []>} : vector<8x32xbf16>, vector<32x128xbf16>, vector<8x128xf32> -> vector<8x128xf32>
    %141 = arith.addf %138, %140 : vector<8x128xf32>
    %142 = arith.negf %141 : vector<8x128xf32>
    %143 = math.exp %142 : vector<8x128xf32>
    %cst_36 = arith.constant 1.000000e+00 : f32
    %144 = vector.broadcast %cst_36 : f32 to vector<8x128xf32>
    %145 = arith.addf %144, %143 : vector<8x128xf32>
    %146 = arith.divf %144, %145 : vector<8x128xf32>
    %147 = math.tanh %141 : vector<8x128xf32>
    %148 = vector.extract_strided_slice %146 {offsets = [0, 0], sizes = [8, 32], strides = [1, 1]} : vector<8x128xf32> to vector<8x32xf32>
    %149 = vector.extract_strided_slice %146 {offsets = [0, 32], sizes = [8, 32], strides = [1, 1]} : vector<8x128xf32> to vector<8x32xf32>
    %150 = vector.extract_strided_slice %147 {offsets = [0, 64], sizes = [8, 32], strides = [1, 1]} : vector<8x128xf32> to vector<8x32xf32>
    %151 = vector.extract_strided_slice %146 {offsets = [0, 96], sizes = [8, 32], strides = [1, 1]} : vector<8x128xf32> to vector<8x32xf32>
    %152 = arith.mulf %149, %110 : vector<8x32xf32>
    %153 = arith.mulf %148, %150 : vector<8x32xf32>
    %154 = arith.addf %152, %153 : vector<8x32xf32>
    %155 = math.tanh %154 : vector<8x32xf32>
    %156 = arith.mulf %151, %155 : vector<8x32xf32>
    %157 = arith.select %136, %156, %109 : vector<8x32xi1>, vector<8x32xf32>
    %158 = arith.select %136, %154, %110 : vector<8x32xi1>, vector<8x32xf32>
    %159 = arith.truncf %156 : vector<8x32xf32> to vector<8x32xbf16>
    %cst_37 = arith.constant dense<0.000000e+00> : vector<8x128xf32>
    %160 = tpu.matmul %159, %32, %cst_37 {dimension_numbers = #tpu.dot_dimension_numbers<[1], [0], [0], [1], [0, 0, 1, 1], [], []>} : vector<8x32xbf16>, vector<32x128xbf16>, vector<8x128xf32> -> vector<8x128xf32>
    %161 = arith.truncf %133 : vector<8x32xf32> to vector<8x32xbf16>
    %cst_38 = arith.constant dense<0.000000e+00> : vector<8x128xf32>
    %162 = tpu.matmul %161, %33, %cst_38 {dimension_numbers = #tpu.dot_dimension_numbers<[1], [0], [0], [1], [0, 0, 1, 1], [], []>} : vector<8x32xbf16>, vector<32x128xbf16>, vector<8x128xf32> -> vector<8x128xf32>
    %163 = arith.addf %160, %162 : vector<8x128xf32>
    %164 = vector.broadcast %34 : vector<1x128xf32> to vector<8x128xf32>
    %165 = arith.addf %163, %164 : vector<8x128xf32>
    %166 = arith.negf %165 : vector<8x128xf32>
    %167 = math.exp %166 : vector<8x128xf32>
    %cst_39 = arith.constant 1.000000e+00 : f32
    %168 = vector.broadcast %cst_39 : f32 to vector<8x128xf32>
    %169 = arith.addf %168, %167 : vector<8x128xf32>
    %170 = arith.divf %168, %169 : vector<8x128xf32>
    %171 = math.tanh %165 : vector<8x128xf32>
    %172 = vector.extract_strided_slice %170 {offsets = [0, 0], sizes = [8, 32], strides = [1, 1]} : vector<8x128xf32> to vector<8x32xf32>
    %173 = vector.extract_strided_slice %170 {offsets = [0, 32], sizes = [8, 32], strides = [1, 1]} : vector<8x128xf32> to vector<8x32xf32>
    %174 = vector.extract_strided_slice %171 {offsets = [0, 64], sizes = [8, 32], strides = [1, 1]} : vector<8x128xf32> to vector<8x32xf32>
    %175 = vector.extract_strided_slice %170 {offsets = [0, 96], sizes = [8, 32], strides = [1, 1]} : vector<8x128xf32> to vector<8x32xf32>
    %176 = arith.mulf %173, %134 : vector<8x32xf32>
    %177 = arith.mulf %172, %174 : vector<8x32xf32>
    %178 = arith.addf %176, %177 : vector<8x32xf32>
    %179 = math.tanh %178 : vector<8x32xf32>
    %180 = arith.mulf %175, %179 : vector<8x32xf32>
    %181 = arith.select %136, %180, %133 : vector<8x32xi1>, vector<8x32xf32>
    %182 = arith.select %136, %178, %134 : vector<8x32xi1>, vector<8x32xf32>
    %c3_i32 = arith.constant 3 : i32
    %183 = vector.broadcast %c3_i32 : i32 to vector<8x32xi32>
    %184 = arith.cmpi sgt, %37, %183 : vector<8x32xi32>
    %185 = vector.extract_strided_slice %30 {offsets = [3, 0, 0], sizes = [1, 8, 128], strides = [1, 1, 1]} : vector<8x8x128xf32> to vector<1x8x128xf32>
    %186 = vector.shape_cast %185 : vector<1x8x128xf32> to vector<8x128xf32>
    %187 = arith.truncf %157 : vector<8x32xf32> to vector<8x32xbf16>
    %cst_40 = arith.constant dense<0.000000e+00> : vector<8x128xf32>
    %188 = tpu.matmul %187, %31, %cst_40 {dimension_numbers = #tpu.dot_dimension_numbers<[1], [0], [0], [1], [0, 0, 1, 1], [], []>} : vector<8x32xbf16>, vector<32x128xbf16>, vector<8x128xf32> -> vector<8x128xf32>
    %189 = arith.addf %186, %188 : vector<8x128xf32>
    %190 = arith.negf %189 : vector<8x128xf32>
    %191 = math.exp %190 : vector<8x128xf32>
    %cst_41 = arith.constant 1.000000e+00 : f32
    %192 = vector.broadcast %cst_41 : f32 to vector<8x128xf32>
    %193 = arith.addf %192, %191 : vector<8x128xf32>
    %194 = arith.divf %192, %193 : vector<8x128xf32>
    %195 = math.tanh %189 : vector<8x128xf32>
    %196 = vector.extract_strided_slice %194 {offsets = [0, 0], sizes = [8, 32], strides = [1, 1]} : vector<8x128xf32> to vector<8x32xf32>
    %197 = vector.extract_strided_slice %194 {offsets = [0, 32], sizes = [8, 32], strides = [1, 1]} : vector<8x128xf32> to vector<8x32xf32>
    %198 = vector.extract_strided_slice %195 {offsets = [0, 64], sizes = [8, 32], strides = [1, 1]} : vector<8x128xf32> to vector<8x32xf32>
    %199 = vector.extract_strided_slice %194 {offsets = [0, 96], sizes = [8, 32], strides = [1, 1]} : vector<8x128xf32> to vector<8x32xf32>
    %200 = arith.mulf %197, %158 : vector<8x32xf32>
    %201 = arith.mulf %196, %198 : vector<8x32xf32>
    %202 = arith.addf %200, %201 : vector<8x32xf32>
    %203 = math.tanh %202 : vector<8x32xf32>
    %204 = arith.mulf %199, %203 : vector<8x32xf32>
    %205 = arith.select %184, %204, %157 : vector<8x32xi1>, vector<8x32xf32>
    %206 = arith.select %184, %202, %158 : vector<8x32xi1>, vector<8x32xf32>
    %207 = arith.truncf %204 : vector<8x32xf32> to vector<8x32xbf16>
    %cst_42 = arith.constant dense<0.000000e+00> : vector<8x128xf32>
    %208 = tpu.matmul %207, %32, %cst_42 {dimension_numbers = #tpu.dot_dimension_numbers<[1], [0], [0], [1], [0, 0, 1, 1], [], []>} : vector<8x32xbf16>, vector<32x128xbf16>, vector<8x128xf32> -> vector<8x128xf32>
    %209 = arith.truncf %181 : vector<8x32xf32> to vector<8x32xbf16>
    %cst_43 = arith.constant dense<0.000000e+00> : vector<8x128xf32>
    %210 = tpu.matmul %209, %33, %cst_43 {dimension_numbers = #tpu.dot_dimension_numbers<[1], [0], [0], [1], [0, 0, 1, 1], [], []>} : vector<8x32xbf16>, vector<32x128xbf16>, vector<8x128xf32> -> vector<8x128xf32>
    %211 = arith.addf %208, %210 : vector<8x128xf32>
    %212 = vector.broadcast %34 : vector<1x128xf32> to vector<8x128xf32>
    %213 = arith.addf %211, %212 : vector<8x128xf32>
    %214 = arith.negf %213 : vector<8x128xf32>
    %215 = math.exp %214 : vector<8x128xf32>
    %cst_44 = arith.constant 1.000000e+00 : f32
    %216 = vector.broadcast %cst_44 : f32 to vector<8x128xf32>
    %217 = arith.addf %216, %215 : vector<8x128xf32>
    %218 = arith.divf %216, %217 : vector<8x128xf32>
    %219 = math.tanh %213 : vector<8x128xf32>
    %220 = vector.extract_strided_slice %218 {offsets = [0, 0], sizes = [8, 32], strides = [1, 1]} : vector<8x128xf32> to vector<8x32xf32>
    %221 = vector.extract_strided_slice %218 {offsets = [0, 32], sizes = [8, 32], strides = [1, 1]} : vector<8x128xf32> to vector<8x32xf32>
    %222 = vector.extract_strided_slice %219 {offsets = [0, 64], sizes = [8, 32], strides = [1, 1]} : vector<8x128xf32> to vector<8x32xf32>
    %223 = vector.extract_strided_slice %218 {offsets = [0, 96], sizes = [8, 32], strides = [1, 1]} : vector<8x128xf32> to vector<8x32xf32>
    %224 = arith.mulf %221, %182 : vector<8x32xf32>
    %225 = arith.mulf %220, %222 : vector<8x32xf32>
    %226 = arith.addf %224, %225 : vector<8x32xf32>
    %227 = math.tanh %226 : vector<8x32xf32>
    %228 = arith.mulf %223, %227 : vector<8x32xf32>
    %229 = arith.select %184, %228, %181 : vector<8x32xi1>, vector<8x32xf32>
    %230 = arith.select %184, %226, %182 : vector<8x32xi1>, vector<8x32xf32>
    %c4_i32 = arith.constant 4 : i32
    %231 = vector.broadcast %c4_i32 : i32 to vector<8x32xi32>
    %232 = arith.cmpi sgt, %37, %231 : vector<8x32xi32>
    %233 = vector.extract_strided_slice %30 {offsets = [4, 0, 0], sizes = [1, 8, 128], strides = [1, 1, 1]} : vector<8x8x128xf32> to vector<1x8x128xf32>
    %234 = vector.shape_cast %233 : vector<1x8x128xf32> to vector<8x128xf32>
    %235 = arith.truncf %205 : vector<8x32xf32> to vector<8x32xbf16>
    %cst_45 = arith.constant dense<0.000000e+00> : vector<8x128xf32>
    %236 = tpu.matmul %235, %31, %cst_45 {dimension_numbers = #tpu.dot_dimension_numbers<[1], [0], [0], [1], [0, 0, 1, 1], [], []>} : vector<8x32xbf16>, vector<32x128xbf16>, vector<8x128xf32> -> vector<8x128xf32>
    %237 = arith.addf %234, %236 : vector<8x128xf32>
    %238 = arith.negf %237 : vector<8x128xf32>
    %239 = math.exp %238 : vector<8x128xf32>
    %cst_46 = arith.constant 1.000000e+00 : f32
    %240 = vector.broadcast %cst_46 : f32 to vector<8x128xf32>
    %241 = arith.addf %240, %239 : vector<8x128xf32>
    %242 = arith.divf %240, %241 : vector<8x128xf32>
    %243 = math.tanh %237 : vector<8x128xf32>
    %244 = vector.extract_strided_slice %242 {offsets = [0, 0], sizes = [8, 32], strides = [1, 1]} : vector<8x128xf32> to vector<8x32xf32>
    %245 = vector.extract_strided_slice %242 {offsets = [0, 32], sizes = [8, 32], strides = [1, 1]} : vector<8x128xf32> to vector<8x32xf32>
    %246 = vector.extract_strided_slice %243 {offsets = [0, 64], sizes = [8, 32], strides = [1, 1]} : vector<8x128xf32> to vector<8x32xf32>
    %247 = vector.extract_strided_slice %242 {offsets = [0, 96], sizes = [8, 32], strides = [1, 1]} : vector<8x128xf32> to vector<8x32xf32>
    %248 = arith.mulf %245, %206 : vector<8x32xf32>
    %249 = arith.mulf %244, %246 : vector<8x32xf32>
    %250 = arith.addf %248, %249 : vector<8x32xf32>
    %251 = math.tanh %250 : vector<8x32xf32>
    %252 = arith.mulf %247, %251 : vector<8x32xf32>
    %253 = arith.select %232, %252, %205 : vector<8x32xi1>, vector<8x32xf32>
    %254 = arith.select %232, %250, %206 : vector<8x32xi1>, vector<8x32xf32>
    %255 = arith.truncf %252 : vector<8x32xf32> to vector<8x32xbf16>
    %cst_47 = arith.constant dense<0.000000e+00> : vector<8x128xf32>
    %256 = tpu.matmul %255, %32, %cst_47 {dimension_numbers = #tpu.dot_dimension_numbers<[1], [0], [0], [1], [0, 0, 1, 1], [], []>} : vector<8x32xbf16>, vector<32x128xbf16>, vector<8x128xf32> -> vector<8x128xf32>
    %257 = arith.truncf %229 : vector<8x32xf32> to vector<8x32xbf16>
    %cst_48 = arith.constant dense<0.000000e+00> : vector<8x128xf32>
    %258 = tpu.matmul %257, %33, %cst_48 {dimension_numbers = #tpu.dot_dimension_numbers<[1], [0], [0], [1], [0, 0, 1, 1], [], []>} : vector<8x32xbf16>, vector<32x128xbf16>, vector<8x128xf32> -> vector<8x128xf32>
    %259 = arith.addf %256, %258 : vector<8x128xf32>
    %260 = vector.broadcast %34 : vector<1x128xf32> to vector<8x128xf32>
    %261 = arith.addf %259, %260 : vector<8x128xf32>
    %262 = arith.negf %261 : vector<8x128xf32>
    %263 = math.exp %262 : vector<8x128xf32>
    %cst_49 = arith.constant 1.000000e+00 : f32
    %264 = vector.broadcast %cst_49 : f32 to vector<8x128xf32>
    %265 = arith.addf %264, %263 : vector<8x128xf32>
    %266 = arith.divf %264, %265 : vector<8x128xf32>
    %267 = math.tanh %261 : vector<8x128xf32>
    %268 = vector.extract_strided_slice %266 {offsets = [0, 0], sizes = [8, 32], strides = [1, 1]} : vector<8x128xf32> to vector<8x32xf32>
    %269 = vector.extract_strided_slice %266 {offsets = [0, 32], sizes = [8, 32], strides = [1, 1]} : vector<8x128xf32> to vector<8x32xf32>
    %270 = vector.extract_strided_slice %267 {offsets = [0, 64], sizes = [8, 32], strides = [1, 1]} : vector<8x128xf32> to vector<8x32xf32>
    %271 = vector.extract_strided_slice %266 {offsets = [0, 96], sizes = [8, 32], strides = [1, 1]} : vector<8x128xf32> to vector<8x32xf32>
    %272 = arith.mulf %269, %230 : vector<8x32xf32>
    %273 = arith.mulf %268, %270 : vector<8x32xf32>
    %274 = arith.addf %272, %273 : vector<8x32xf32>
    %275 = math.tanh %274 : vector<8x32xf32>
    %276 = arith.mulf %271, %275 : vector<8x32xf32>
    %277 = arith.select %232, %276, %229 : vector<8x32xi1>, vector<8x32xf32>
    %278 = arith.select %232, %274, %230 : vector<8x32xi1>, vector<8x32xf32>
    %c5_i32 = arith.constant 5 : i32
    %279 = vector.broadcast %c5_i32 : i32 to vector<8x32xi32>
    %280 = arith.cmpi sgt, %37, %279 : vector<8x32xi32>
    %281 = vector.extract_strided_slice %30 {offsets = [5, 0, 0], sizes = [1, 8, 128], strides = [1, 1, 1]} : vector<8x8x128xf32> to vector<1x8x128xf32>
    %282 = vector.shape_cast %281 : vector<1x8x128xf32> to vector<8x128xf32>
    %283 = arith.truncf %253 : vector<8x32xf32> to vector<8x32xbf16>
    %cst_50 = arith.constant dense<0.000000e+00> : vector<8x128xf32>
    %284 = tpu.matmul %283, %31, %cst_50 {dimension_numbers = #tpu.dot_dimension_numbers<[1], [0], [0], [1], [0, 0, 1, 1], [], []>} : vector<8x32xbf16>, vector<32x128xbf16>, vector<8x128xf32> -> vector<8x128xf32>
    %285 = arith.addf %282, %284 : vector<8x128xf32>
    %286 = arith.negf %285 : vector<8x128xf32>
    %287 = math.exp %286 : vector<8x128xf32>
    %cst_51 = arith.constant 1.000000e+00 : f32
    %288 = vector.broadcast %cst_51 : f32 to vector<8x128xf32>
    %289 = arith.addf %288, %287 : vector<8x128xf32>
    %290 = arith.divf %288, %289 : vector<8x128xf32>
    %291 = math.tanh %285 : vector<8x128xf32>
    %292 = vector.extract_strided_slice %290 {offsets = [0, 0], sizes = [8, 32], strides = [1, 1]} : vector<8x128xf32> to vector<8x32xf32>
    %293 = vector.extract_strided_slice %290 {offsets = [0, 32], sizes = [8, 32], strides = [1, 1]} : vector<8x128xf32> to vector<8x32xf32>
    %294 = vector.extract_strided_slice %291 {offsets = [0, 64], sizes = [8, 32], strides = [1, 1]} : vector<8x128xf32> to vector<8x32xf32>
    %295 = vector.extract_strided_slice %290 {offsets = [0, 96], sizes = [8, 32], strides = [1, 1]} : vector<8x128xf32> to vector<8x32xf32>
    %296 = arith.mulf %293, %254 : vector<8x32xf32>
    %297 = arith.mulf %292, %294 : vector<8x32xf32>
    %298 = arith.addf %296, %297 : vector<8x32xf32>
    %299 = math.tanh %298 : vector<8x32xf32>
    %300 = arith.mulf %295, %299 : vector<8x32xf32>
    %301 = arith.select %280, %300, %253 : vector<8x32xi1>, vector<8x32xf32>
    %302 = arith.select %280, %298, %254 : vector<8x32xi1>, vector<8x32xf32>
    %303 = arith.truncf %300 : vector<8x32xf32> to vector<8x32xbf16>
    %cst_52 = arith.constant dense<0.000000e+00> : vector<8x128xf32>
    %304 = tpu.matmul %303, %32, %cst_52 {dimension_numbers = #tpu.dot_dimension_numbers<[1], [0], [0], [1], [0, 0, 1, 1], [], []>} : vector<8x32xbf16>, vector<32x128xbf16>, vector<8x128xf32> -> vector<8x128xf32>
    %305 = arith.truncf %277 : vector<8x32xf32> to vector<8x32xbf16>
    %cst_53 = arith.constant dense<0.000000e+00> : vector<8x128xf32>
    %306 = tpu.matmul %305, %33, %cst_53 {dimension_numbers = #tpu.dot_dimension_numbers<[1], [0], [0], [1], [0, 0, 1, 1], [], []>} : vector<8x32xbf16>, vector<32x128xbf16>, vector<8x128xf32> -> vector<8x128xf32>
    %307 = arith.addf %304, %306 : vector<8x128xf32>
    %308 = vector.broadcast %34 : vector<1x128xf32> to vector<8x128xf32>
    %309 = arith.addf %307, %308 : vector<8x128xf32>
    %310 = arith.negf %309 : vector<8x128xf32>
    %311 = math.exp %310 : vector<8x128xf32>
    %cst_54 = arith.constant 1.000000e+00 : f32
    %312 = vector.broadcast %cst_54 : f32 to vector<8x128xf32>
    %313 = arith.addf %312, %311 : vector<8x128xf32>
    %314 = arith.divf %312, %313 : vector<8x128xf32>
    %315 = math.tanh %309 : vector<8x128xf32>
    %316 = vector.extract_strided_slice %314 {offsets = [0, 0], sizes = [8, 32], strides = [1, 1]} : vector<8x128xf32> to vector<8x32xf32>
    %317 = vector.extract_strided_slice %314 {offsets = [0, 32], sizes = [8, 32], strides = [1, 1]} : vector<8x128xf32> to vector<8x32xf32>
    %318 = vector.extract_strided_slice %315 {offsets = [0, 64], sizes = [8, 32], strides = [1, 1]} : vector<8x128xf32> to vector<8x32xf32>
    %319 = vector.extract_strided_slice %314 {offsets = [0, 96], sizes = [8, 32], strides = [1, 1]} : vector<8x128xf32> to vector<8x32xf32>
    %320 = arith.mulf %317, %278 : vector<8x32xf32>
    %321 = arith.mulf %316, %318 : vector<8x32xf32>
    %322 = arith.addf %320, %321 : vector<8x32xf32>
    %323 = math.tanh %322 : vector<8x32xf32>
    %324 = arith.mulf %319, %323 : vector<8x32xf32>
    %325 = arith.select %280, %324, %277 : vector<8x32xi1>, vector<8x32xf32>
    %326 = arith.select %280, %322, %278 : vector<8x32xi1>, vector<8x32xf32>
    %c6_i32 = arith.constant 6 : i32
    %327 = vector.broadcast %c6_i32 : i32 to vector<8x32xi32>
    %328 = arith.cmpi sgt, %37, %327 : vector<8x32xi32>
    %329 = vector.extract_strided_slice %30 {offsets = [6, 0, 0], sizes = [1, 8, 128], strides = [1, 1, 1]} : vector<8x8x128xf32> to vector<1x8x128xf32>
    %330 = vector.shape_cast %329 : vector<1x8x128xf32> to vector<8x128xf32>
    %331 = arith.truncf %301 : vector<8x32xf32> to vector<8x32xbf16>
    %cst_55 = arith.constant dense<0.000000e+00> : vector<8x128xf32>
    %332 = tpu.matmul %331, %31, %cst_55 {dimension_numbers = #tpu.dot_dimension_numbers<[1], [0], [0], [1], [0, 0, 1, 1], [], []>} : vector<8x32xbf16>, vector<32x128xbf16>, vector<8x128xf32> -> vector<8x128xf32>
    %333 = arith.addf %330, %332 : vector<8x128xf32>
    %334 = arith.negf %333 : vector<8x128xf32>
    %335 = math.exp %334 : vector<8x128xf32>
    %cst_56 = arith.constant 1.000000e+00 : f32
    %336 = vector.broadcast %cst_56 : f32 to vector<8x128xf32>
    %337 = arith.addf %336, %335 : vector<8x128xf32>
    %338 = arith.divf %336, %337 : vector<8x128xf32>
    %339 = math.tanh %333 : vector<8x128xf32>
    %340 = vector.extract_strided_slice %338 {offsets = [0, 0], sizes = [8, 32], strides = [1, 1]} : vector<8x128xf32> to vector<8x32xf32>
    %341 = vector.extract_strided_slice %338 {offsets = [0, 32], sizes = [8, 32], strides = [1, 1]} : vector<8x128xf32> to vector<8x32xf32>
    %342 = vector.extract_strided_slice %339 {offsets = [0, 64], sizes = [8, 32], strides = [1, 1]} : vector<8x128xf32> to vector<8x32xf32>
    %343 = vector.extract_strided_slice %338 {offsets = [0, 96], sizes = [8, 32], strides = [1, 1]} : vector<8x128xf32> to vector<8x32xf32>
    %344 = arith.mulf %341, %302 : vector<8x32xf32>
    %345 = arith.mulf %340, %342 : vector<8x32xf32>
    %346 = arith.addf %344, %345 : vector<8x32xf32>
    %347 = math.tanh %346 : vector<8x32xf32>
    %348 = arith.mulf %343, %347 : vector<8x32xf32>
    %349 = arith.select %328, %348, %301 : vector<8x32xi1>, vector<8x32xf32>
    %350 = arith.select %328, %346, %302 : vector<8x32xi1>, vector<8x32xf32>
    %351 = arith.truncf %348 : vector<8x32xf32> to vector<8x32xbf16>
    %cst_57 = arith.constant dense<0.000000e+00> : vector<8x128xf32>
    %352 = tpu.matmul %351, %32, %cst_57 {dimension_numbers = #tpu.dot_dimension_numbers<[1], [0], [0], [1], [0, 0, 1, 1], [], []>} : vector<8x32xbf16>, vector<32x128xbf16>, vector<8x128xf32> -> vector<8x128xf32>
    %353 = arith.truncf %325 : vector<8x32xf32> to vector<8x32xbf16>
    %cst_58 = arith.constant dense<0.000000e+00> : vector<8x128xf32>
    %354 = tpu.matmul %353, %33, %cst_58 {dimension_numbers = #tpu.dot_dimension_numbers<[1], [0], [0], [1], [0, 0, 1, 1], [], []>} : vector<8x32xbf16>, vector<32x128xbf16>, vector<8x128xf32> -> vector<8x128xf32>
    %355 = arith.addf %352, %354 : vector<8x128xf32>
    %356 = vector.broadcast %34 : vector<1x128xf32> to vector<8x128xf32>
    %357 = arith.addf %355, %356 : vector<8x128xf32>
    %358 = arith.negf %357 : vector<8x128xf32>
    %359 = math.exp %358 : vector<8x128xf32>
    %cst_59 = arith.constant 1.000000e+00 : f32
    %360 = vector.broadcast %cst_59 : f32 to vector<8x128xf32>
    %361 = arith.addf %360, %359 : vector<8x128xf32>
    %362 = arith.divf %360, %361 : vector<8x128xf32>
    %363 = math.tanh %357 : vector<8x128xf32>
    %364 = vector.extract_strided_slice %362 {offsets = [0, 0], sizes = [8, 32], strides = [1, 1]} : vector<8x128xf32> to vector<8x32xf32>
    %365 = vector.extract_strided_slice %362 {offsets = [0, 32], sizes = [8, 32], strides = [1, 1]} : vector<8x128xf32> to vector<8x32xf32>
    %366 = vector.extract_strided_slice %363 {offsets = [0, 64], sizes = [8, 32], strides = [1, 1]} : vector<8x128xf32> to vector<8x32xf32>
    %367 = vector.extract_strided_slice %362 {offsets = [0, 96], sizes = [8, 32], strides = [1, 1]} : vector<8x128xf32> to vector<8x32xf32>
    %368 = arith.mulf %365, %326 : vector<8x32xf32>
    %369 = arith.mulf %364, %366 : vector<8x32xf32>
    %370 = arith.addf %368, %369 : vector<8x32xf32>
    %371 = math.tanh %370 : vector<8x32xf32>
    %372 = arith.mulf %367, %371 : vector<8x32xf32>
    %373 = arith.select %328, %372, %325 : vector<8x32xi1>, vector<8x32xf32>
    %374 = arith.select %328, %370, %326 : vector<8x32xi1>, vector<8x32xf32>
    %c7_i32 = arith.constant 7 : i32
    %375 = vector.broadcast %c7_i32 : i32 to vector<8x32xi32>
    %376 = arith.cmpi sgt, %37, %375 : vector<8x32xi32>
    %377 = vector.extract_strided_slice %30 {offsets = [7, 0, 0], sizes = [1, 8, 128], strides = [1, 1, 1]} : vector<8x8x128xf32> to vector<1x8x128xf32>
    %378 = vector.shape_cast %377 : vector<1x8x128xf32> to vector<8x128xf32>
    %379 = arith.truncf %349 : vector<8x32xf32> to vector<8x32xbf16>
    %cst_60 = arith.constant dense<0.000000e+00> : vector<8x128xf32>
    %380 = tpu.matmul %379, %31, %cst_60 {dimension_numbers = #tpu.dot_dimension_numbers<[1], [0], [0], [1], [0, 0, 1, 1], [], []>} : vector<8x32xbf16>, vector<32x128xbf16>, vector<8x128xf32> -> vector<8x128xf32>
    %381 = arith.addf %378, %380 : vector<8x128xf32>
    %382 = arith.negf %381 : vector<8x128xf32>
    %383 = math.exp %382 : vector<8x128xf32>
    %cst_61 = arith.constant 1.000000e+00 : f32
    %384 = vector.broadcast %cst_61 : f32 to vector<8x128xf32>
    %385 = arith.addf %384, %383 : vector<8x128xf32>
    %386 = arith.divf %384, %385 : vector<8x128xf32>
    %387 = math.tanh %381 : vector<8x128xf32>
    %388 = vector.extract_strided_slice %386 {offsets = [0, 0], sizes = [8, 32], strides = [1, 1]} : vector<8x128xf32> to vector<8x32xf32>
    %389 = vector.extract_strided_slice %386 {offsets = [0, 32], sizes = [8, 32], strides = [1, 1]} : vector<8x128xf32> to vector<8x32xf32>
    %390 = vector.extract_strided_slice %387 {offsets = [0, 64], sizes = [8, 32], strides = [1, 1]} : vector<8x128xf32> to vector<8x32xf32>
    %391 = vector.extract_strided_slice %386 {offsets = [0, 96], sizes = [8, 32], strides = [1, 1]} : vector<8x128xf32> to vector<8x32xf32>
    %392 = arith.mulf %389, %350 : vector<8x32xf32>
    %393 = arith.mulf %388, %390 : vector<8x32xf32>
    %394 = arith.addf %392, %393 : vector<8x32xf32>
    %395 = math.tanh %394 : vector<8x32xf32>
    %396 = arith.mulf %391, %395 : vector<8x32xf32>
    %397 = arith.truncf %396 : vector<8x32xf32> to vector<8x32xbf16>
    %cst_62 = arith.constant dense<0.000000e+00> : vector<8x128xf32>
    %398 = tpu.matmul %397, %32, %cst_62 {dimension_numbers = #tpu.dot_dimension_numbers<[1], [0], [0], [1], [0, 0, 1, 1], [], []>} : vector<8x32xbf16>, vector<32x128xbf16>, vector<8x128xf32> -> vector<8x128xf32>
    %399 = arith.truncf %373 : vector<8x32xf32> to vector<8x32xbf16>
    %cst_63 = arith.constant dense<0.000000e+00> : vector<8x128xf32>
    %400 = tpu.matmul %399, %33, %cst_63 {dimension_numbers = #tpu.dot_dimension_numbers<[1], [0], [0], [1], [0, 0, 1, 1], [], []>} : vector<8x32xbf16>, vector<32x128xbf16>, vector<8x128xf32> -> vector<8x128xf32>
    %401 = arith.addf %398, %400 : vector<8x128xf32>
    %402 = vector.broadcast %34 : vector<1x128xf32> to vector<8x128xf32>
    %403 = arith.addf %401, %402 : vector<8x128xf32>
    %404 = arith.negf %403 : vector<8x128xf32>
    %405 = math.exp %404 : vector<8x128xf32>
    %cst_64 = arith.constant 1.000000e+00 : f32
    %406 = vector.broadcast %cst_64 : f32 to vector<8x128xf32>
    %407 = arith.addf %406, %405 : vector<8x128xf32>
    %408 = arith.divf %406, %407 : vector<8x128xf32>
    %409 = math.tanh %403 : vector<8x128xf32>
    %410 = vector.extract_strided_slice %408 {offsets = [0, 0], sizes = [8, 32], strides = [1, 1]} : vector<8x128xf32> to vector<8x32xf32>
    %411 = vector.extract_strided_slice %408 {offsets = [0, 32], sizes = [8, 32], strides = [1, 1]} : vector<8x128xf32> to vector<8x32xf32>
    %412 = vector.extract_strided_slice %409 {offsets = [0, 64], sizes = [8, 32], strides = [1, 1]} : vector<8x128xf32> to vector<8x32xf32>
    %413 = vector.extract_strided_slice %408 {offsets = [0, 96], sizes = [8, 32], strides = [1, 1]} : vector<8x128xf32> to vector<8x32xf32>
    %414 = arith.mulf %411, %374 : vector<8x32xf32>
    %415 = arith.mulf %410, %412 : vector<8x32xf32>
    %416 = arith.addf %414, %415 : vector<8x32xf32>
    %417 = math.tanh %416 : vector<8x32xf32>
    %418 = arith.mulf %413, %417 : vector<8x32xf32>
    %419 = arith.select %376, %418, %373 : vector<8x32xi1>, vector<8x32xf32>
    %c0_65 = arith.constant 0 : index
    %c0_66 = arith.constant 0 : index
    %420 = vector.load %arg11[%c0_65, %c0_66] : memref<8x32xf32, #tpu.memory_space<vmem>>, vector<8x32xf32>
    tpu.vector_store %arg11[%c0_65, %c0_66], %419 {strides = array<i32>} : memref<8x32xf32, #tpu.memory_space<vmem>>, vector<8x32xf32>,
    return
  }
  func.func @transform_0(%arg0: i32) -> (i32, i32) {
    %c0_i32 = arith.constant 0 : i32
    %c0_i32_0 = arith.constant 0 : i32
    %c0_i32_1 = arith.constant 0 : i32
    return %c0_i32, %c0_i32_0 : i32, i32
  }
  func.func @transform_1(%arg0: i32) -> (i32, i32) {
    %c0_i32 = arith.constant 0 : i32
    %c0_i32_0 = arith.constant 0 : i32
    %c0_i32_1 = arith.constant 0 : i32
    return %c0_i32, %c0_i32_0 : i32, i32
  }
  func.func @transform_2(%arg0: i32) -> (i32, i32) {
    %c0_i32 = arith.constant 0 : i32
    %c0_i32_0 = arith.constant 0 : i32
    %c0_i32_1 = arith.constant 0 : i32
    return %c0_i32, %c0_i32_0 : i32, i32
  }
  func.func @transform_3(%arg0: i32) -> (i32, i32) {
    %c0_i32 = arith.constant 0 : i32
    %c0_i32_0 = arith.constant 0 : i32
    %c0_i32_1 = arith.constant 0 : i32
    return %c0_i32, %c0_i32_0 : i32, i32
  }
  func.func @transform_4(%arg0: i32) -> (i32, i32) {
    %c0_i32 = arith.constant 0 : i32
    %c0_i32_0 = arith.constant 0 : i32
    %c0_i32_1 = arith.constant 0 : i32
    return %c0_i32, %c0_i32_0 : i32, i32
  }
  func.func @transform_5(%arg0: i32) -> (i32, i32) {
    %c0_i32 = arith.constant 0 : i32
    %c0_i32_0 = arith.constant 0 : i32
    %c0_i32_1 = arith.constant 0 : i32
    return %c0_i32, %c0_i32_0 : i32, i32
  }
  func.func @transform_6(%arg0: i32) -> (i32, i32) {
    %c0_i32 = arith.constant 0 : i32
    %c0_i32_0 = arith.constant 0 : i32
    %c0_i32_1 = arith.constant 0 : i32
    return %c0_i32, %c0_i32_0 : i32, i32
  }
  func.func @transform_7(%arg0: i32) -> (i32, i32) {
    %c0_i32 = arith.constant 0 : i32
    %c0_i32_0 = arith.constant 0 : i32
    %c0_i32_1 = arith.constant 0 : i32
    return %c0_i32, %c0_i32_0 : i32, i32
  }
  func.func @transform_8(%arg0: i32) -> (i32, i32) {
    %c0_i32 = arith.constant 0 : i32
    %c0_i32_0 = arith.constant 0 : i32
    %c0_i32_1 = arith.constant 0 : i32
    return %c0_i32, %c0_i32_0 : i32, i32
  }
  func.func @transform_9(%arg0: i32) -> (i32, i32) {
    %c0_i32 = arith.constant 0 : i32
    %c0_i32_0 = arith.constant 0 : i32
    %c0_i32_1 = arith.constant 0 : i32
    return %c0_i32, %c0_i32_0 : i32, i32
  }
  func.func @transform_10(%arg0: i32) -> (i32, i32) {
    %c0_i32 = arith.constant 0 : i32
    %c0_i32_0 = arith.constant 0 : i32
    %c0_i32_1 = arith.constant 0 : i32
    return %c0_i32, %c0_i32_0 : i32, i32
  }
}

</mosaic_0001>

<llo_original>
// kernel: tpu_custom_call.1
$region0: #{tpu_custom_call.1}
  #allocation0 [shape = 'u32[]', space=smem, size = 0x4, offset = 0x4, fixed_abs, tag = 'smem constant byte address 0x4 - core index']
  #allocation1 [shape = 'u32[144,128]{1,0:T(1,128)}', space=vmem, size = 0x12000, scoped, tag = 'internal scratch']
  %s0 = inlined_call_operand.hbm [shape: f32[64,64], index: 0, kind: input, shape index: {}]
  %s1 = inlined_call_operand.vmem [shape: f32[1,64], index: 1, kind: input, shape index: {}]
  %s2 = inlined_call_operand.vmem [shape: f32[1,64], index: 2, kind: input, shape index: {}]
  %s3 = inlined_call_operand.vmem [shape: s32[8,1], index: 3, kind: input, shape index: {}]
  %s4 = inlined_call_operand.hbm [shape: bf16[64,128], index: 4, kind: input, shape index: {}]
  %s5 = inlined_call_operand.vmem [shape: bf16[32,128], index: 5, kind: input, shape index: {}]
  %s6 = inlined_call_operand.vmem [shape: f32[1,128], index: 6, kind: input, shape index: {}]
  %s7 = inlined_call_operand.hbm [shape: bf16[32,128], index: 7, kind: input, shape index: {}]
  %s8 = inlined_call_operand.hbm [shape: bf16[32,128], index: 8, kind: input, shape index: {}]
  %s9 = inlined_call_operand.vmem [shape: f32[1,128], index: 9, kind: input, shape index: {}]
  %s10 = inlined_call_operand.hbm [shape: f32[8,32], index: 10, kind: output, shape index: {}]
  %s11 = sld [smem:[#allocation0]]
  $region66: #{tpu_custom_call.1} parent=0
    _
  %s13 = ssub.s32 1, %s11
  %s14 = scalar_select 0, %s13, %s11
  $region1: #{tpu_custom_call.1} parent=0
    #allocation2 [shape = 'u8[32768]{0}', space=vmem, size = 0x8000, scoped, tag = 'input window, operand 0, single buffered']
    #allocation3 [shape = 's32[1]{0}', space=sflag, size = 0x4, scoped, tag = 'scoped memory for tpu_custom_call.1']
    #allocation4 [shape = 's32[1]{0}', space=sflag, size = 0x4, scoped, tag = 'scoped memory for tpu_custom_call.1']
    #allocation5 [shape = 'u8[16384]{0}', space=vmem, size = 0x4000, scoped, tag = 'input window, operand 4, single buffered']
    #allocation6 [shape = 's32[1]{0}', space=sflag, size = 0x4, scoped, tag = 'scoped memory for tpu_custom_call.1']
    #allocation7 [shape = 'u8[8192]{0}', space=vmem, size = 0x2000, scoped, tag = 'input window, operand 7, single buffered']
    #allocation8 [shape = 'u8[8192]{0}', space=vmem, size = 0x2000, scoped, tag = 'input window, operand 8, single buffered']
    #allocation9 [shape = 's32[1]{0}', space=sflag, size = 0x4, scoped, tag = 'scoped memory for tpu_custom_call.1']
    #allocation10 [shape = 'u8[4096]{0}', space=vmem, size = 0x1000, scoped, tag = 'output window, operand 0, single buffered']
    %15 = vsyncpa [#allocation3], 0
    %16 = vsyncpa [#allocation6], 0
    %17 = vsyncpa [#allocation9], 0
    %18 = vsyncpa [#allocation4], 0
    // Predicated region
    $region2: #{tpu_custom_call.1} parent=1 // pred_check
      _
    $region3: #{tpu_custom_call.1} parent=1 // pred_check_branch
      %20 = sbr.rel (0) target = $region5
    $region4: #{tpu_custom_call.1} parent=1 // pred_region
      %s22 = ssub.s32 1024, 1024
      %23 = vsyncadd [#allocation3], %s22
      %s24 = sshll.u32 [#allocation2], 4
      %s25 = int_to_ptr.vmem [resolvable:$true] %s24
      %30 = dma.hbm_to_vmem [thread:$0]  %s0, 1024, %s25, [#allocation3], 128, 128, 8
    $region5: #{tpu_custom_call.1} parent=1 // pred_fallthru
      _
    // Predicated region
    $region6: #{tpu_custom_call.1} parent=1 // pred_check
      _
    $region7: #{tpu_custom_call.1} parent=1 // pred_check_branch
      %32 = sbr.rel (0) target = $region9
    $region8: #{tpu_custom_call.1} parent=1 // pred_region
      _
    $region9: #{tpu_custom_call.1} parent=1 // pred_fallthru
      _
    // Predicated region
    $region10: #{tpu_custom_call.1} parent=1 // pred_check
      _
    $region11: #{tpu_custom_call.1} parent=1 // pred_check_branch
      %34 = sbr.rel (0) target = $region13
    $region12: #{tpu_custom_call.1} parent=1 // pred_region
      _
    $region13: #{tpu_custom_call.1} parent=1 // pred_fallthru
      _
    // Predicated region
    $region14: #{tpu_custom_call.1} parent=1 // pred_check
      _
    $region15: #{tpu_custom_call.1} parent=1 // pred_check_branch
      %36 = sbr.rel (0) target = $region17
    $region16: #{tpu_custom_call.1} parent=1 // pred_region
      _
    $region17: #{tpu_custom_call.1} parent=1 // pred_fallthru
      _
    // Predicated region
    $region18: #{tpu_custom_call.1} parent=1 // pred_check
      _
    $region19: #{tpu_custom_call.1} parent=1 // pred_check_branch
      %38 = sbr.rel (0) target = $region21
    $region20: #{tpu_custom_call.1} parent=1 // pred_region
      %s40 = ssub.s32 512, 512
      %41 = vsyncadd [#allocation6], %s40
      %s42 = sshll.u32 [#allocation5], 4
      %s43 = int_to_ptr.vmem [resolvable:$true] %s42
      %48 = dma.hbm_to_vmem [thread:$0]  %s4, 512, %s43, [#allocation6], 64, 64, 4
    $region21: #{tpu_custom_call.1} parent=1 // pred_fallthru
      _
    // Predicated region
    $region22: #{tpu_custom_call.1} parent=1 // pred_check
      _
    $region23: #{tpu_custom_call.1} parent=1 // pred_check_branch
      %50 = sbr.rel (0) target = $region25
    $region24: #{tpu_custom_call.1} parent=1 // pred_region
      _
    $region25: #{tpu_custom_call.1} parent=1 // pred_fallthru
      _
    // Predicated region
    $region26: #{tpu_custom_call.1} parent=1 // pred_check
      _
    $region27: #{tpu_custom_call.1} parent=1 // pred_check_branch
      %52 = sbr.rel (0) target = $region29
    $region28: #{tpu_custom_call.1} parent=1 // pred_region
      _
    $region29: #{tpu_custom_call.1} parent=1 // pred_fallthru
      _
    // Predicated region
    $region30: #{tpu_custom_call.1} parent=1 // pred_check
      _
    $region31: #{tpu_custom_call.1} parent=1 // pred_check_branch
      %54 = sbr.rel (0) target = $region33
    $region32: #{tpu_custom_call.1} parent=1 // pred_region
      %s56 = ssub.s32 256, 256
      %57 = vsyncadd [#allocation6], %s56
      %s58 = sshll.u32 [#allocation7], 4
      %s59 = int_to_ptr.vmem [resolvable:$true] %s58
      %64 = dma.hbm_to_vmem [thread:$0]  %s7, 256, %s59, [#allocation6], 64, 64, 4
    $region33: #{tpu_custom_call.1} parent=1 // pred_fallthru
      _
    // Predicated region
    $region34: #{tpu_custom_call.1} parent=1 // pred_check
      _
    $region35: #{tpu_custom_call.1} parent=1 // pred_check_branch
      %66 = sbr.rel (0) target = $region37
    $region36: #{tpu_custom_call.1} parent=1 // pred_region
      %s68 = ssub.s32 256, 256
      %69 = vsyncadd [#allocation9], %s68
      %s70 = sshll.u32 [#allocation8], 4
      %s71 = int_to_ptr.vmem [resolvable:$true] %s70
      %76 = dma.hbm_to_vmem [thread:$0]  %s8, 256, %s71, [#allocation9], 64, 64, 4
    $region37: #{tpu_custom_call.1} parent=1 // pred_fallthru
      _
    // Predicated region
    $region38: #{tpu_custom_call.1} parent=1 // pred_check
      _
    $region39: #{tpu_custom_call.1} parent=1 // pred_check_branch
      %78 = sbr.rel (0) target = $region41
    $region40: #{tpu_custom_call.1} parent=1 // pred_region
      _
    $region41: #{tpu_custom_call.1} parent=1 // pred_fallthru
      _
    // Predicated region
    $region42: #{tpu_custom_call.1} parent=1 // pred_check
      _
    $region43: #{tpu_custom_call.1} parent=1 // pred_check_branch
      %80 = sbr.rel (0) target = $region45
    $region44: #{tpu_custom_call.1} parent=1 // pred_region
      %81 = dma.done [#allocation3], 1024
    $region45: #{tpu_custom_call.1} parent=1 // pred_fallthru
      _
    // Predicated region
    $region46: #{tpu_custom_call.1} parent=1 // pred_check
      _
    $region47: #{tpu_custom_call.1} parent=1 // pred_check_branch
      %83 = sbr.rel (0) target = $region49
    $region48: #{tpu_custom_call.1} parent=1 // pred_region
      %84 = dma.done [#allocation6], 512
    $region49: #{tpu_custom_call.1} parent=1 // pred_fallthru
      _
    // Predicated region
    $region50: #{tpu_custom_call.1} parent=1 // pred_check
      _
    $region51: #{tpu_custom_call.1} parent=1 // pred_check_branch
      %86 = sbr.rel (0) target = $region53
    $region52: #{tpu_custom_call.1} parent=1 // pred_region
      %87 = dma.done [#allocation6], 256
    $region53: #{tpu_custom_call.1} parent=1 // pred_fallthru
      _
    // Predicated region
    $region54: #{tpu_custom_call.1} parent=1 // pred_check
      _
    $region55: #{tpu_custom_call.1} parent=1 // pred_check_branch
      %89 = sbr.rel (0) target = $region57
    $region56: #{tpu_custom_call.1} parent=1 // pred_region
      %90 = dma.done [#allocation9], 256
    $region57: #{tpu_custom_call.1} parent=1 // pred_fallthru
      _
    %v92 = vld [vmem:[#allocation2] sm:$0xff]
    %v93 = vld [vmem:[#allocation2 + $0x8] sm:$0xff]
    %v94 = vld [vmem:[#allocation2 + $0x10] sm:$0xff]
    %v95 = vld [vmem:[#allocation2 + $0x18] sm:$0xff]
    %v96 = vld [vmem:[#allocation2 + $0x20] sm:$0xff]
    %v97 = vld [vmem:[#allocation2 + $0x28] sm:$0xff]
    %v98 = vld [vmem:[#allocation2 + $0x30] sm:$0xff]
    %v99 = vld [vmem:[#allocation2 + $0x38] sm:$0xff]
    %vm100 = vcmask 523264
    %v101 = vsel %vm100, %v92, 0.0
    %v102 = vsel %vm100, %v93, 0.0
    %v103 = vadd.f32 %v101, %v102
    %v104 = vsel %vm100, %v94, 0.0
    %v105 = vadd.f32 %v103, %v104
    %v106 = vsel %vm100, %v95, 0.0
    %v107 = vadd.f32 %v105, %v106
    %v108 = vsel %vm100, %v96, 0.0
    %v109 = vadd.f32 %v107, %v108
    %v110 = vsel %vm100, %v97, 0.0
    %v111 = vadd.f32 %v109, %v110
    %v112 = vsel %vm100, %v98, 0.0
    %v113 = vadd.f32 %v111, %v112
    %v114 = vsel %vm100, %v99, 0.0
    %v115 = vadd.f32 %v113, %v114
    %v116 = vrot.slane %v115, 4
    %v117 = vadd.f32 %v115, %v116
    %v118 = vrot.slane %v117, 2
    %v119 = vadd.f32 %v117, %v118
    %v120 = vrot.slane %v119, 1
    %v121 = vadd.f32 %v119, %v120
    %v122 = vmul.f32 %v121, 0.03125
    %v123 = vmul.f32 %v92, %v92
    %v124 = vmul.f32 %v93, %v93
    %v125 = vmul.f32 %v94, %v94
    %v126 = vmul.f32 %v95, %v95
    %v127 = vmul.f32 %v96, %v96
    %v128 = vmul.f32 %v97, %v97
    %v129 = vmul.f32 %v98, %v98
    %v130 = vmul.f32 %v99, %v99
    %v131 = vsel %vm100, %v123, 0.0
    %v132 = vsel %vm100, %v124, 0.0
    %v133 = vadd.f32 %v131, %v132
    %v134 = vsel %vm100, %v125, 0.0
    %v135 = vadd.f32 %v133, %v134
    %v136 = vsel %vm100, %v126, 0.0
    %v137 = vadd.f32 %v135, %v136
    %v138 = vsel %vm100, %v127, 0.0
    %v139 = vadd.f32 %v137, %v138
    %v140 = vsel %vm100, %v128, 0.0
    %v141 = vadd.f32 %v139, %v140
    %v142 = vsel %vm100, %v129, 0.0
    %v143 = vadd.f32 %v141, %v142
    %v144 = vsel %vm100, %v130, 0.0
    %v145 = vadd.f32 %v143, %v144
    %v146 = vrot.slane %v145, 4
    %v147 = vadd.f32 %v145, %v146
    %v148 = vrot.slane %v147, 2
    %v149 = vadd.f32 %v147, %v148
    %v150 = vrot.slane %v149, 1
    %v151 = vadd.f32 %v149, %v150
    %v152 = vmul.f32 %v151, 0.03125
    %v153 = vmul.f32 %v122, %v122
    %v154 = vsub.f32 %v152, %v153
    %v155 = vadd.f32 %v154, 1e-05
    %v156 = vrsqrt.pop %v155
    %v157 = vld [vmem:[%s1] sm:$0x1]
    %v158 = vmul.f32 %v156, %v157
    %v159 = vld [vmem:[%s2] sm:$0x1]
    %v160 = vmul.f32 %v122, %v158
    %v161 = vsub.f32 %v159, %v160
    %v162 = vlaneseq
    %v163 = vshrl.u32 %v162, 7
    %v164 = vsub.s32 0, %v163
    %v165 = vrot.slane %v158, %v164
    %v166 = vmul.f32 %v92, %v165
    %v167 = vmul.f32 %v93, %v165
    %v168 = vmul.f32 %v94, %v165
    %v169 = vmul.f32 %v95, %v165
    %v170 = vmul.f32 %v96, %v165
    %v171 = vmul.f32 %v97, %v165
    %v172 = vmul.f32 %v98, %v165
    %v173 = vmul.f32 %v99, %v165
    %v175 = vlaneseq
    %v176 = vshrl.u32 %v175, 7
    %v177 = vsub.s32 0, %v176
    %v178 = vrot.slane %v161, %v177
    %v180 = vadd.f32 %v166, %v178
    %v181 = vadd.f32 %v167, %v178
    %v182 = vadd.f32 %v168, %v178
    %v183 = vadd.f32 %v169, %v178
    %v184 = vadd.f32 %v170, %v178
    %v185 = vadd.f32 %v171, %v178
    %v186 = vadd.f32 %v172, %v178
    %v187 = vadd.f32 %v173, %v178
    %v188 = vpack.c.bf16 %v181, %v180
    %v189 = vpack.c.bf16 %v183, %v182
    %v190 = vpack.c.bf16 %v185, %v184
    %v191 = vpack.c.bf16 %v187, %v186
    %v192 = vld [vmem:[#allocation5] sm:$0xf]
    %v193 = vld [vmem:[#allocation5 + $0x4] sm:$0xf]
    %v194 = vld [vmem:[#allocation5 + $0x8] sm:$0xf]
    %v195 = vld [vmem:[#allocation5 + $0xc] sm:$0xf]
    %v196 = vld [vmem:[#allocation5 + $0x10] sm:$0xf]
    %v197 = vld [vmem:[#allocation5 + $0x14] sm:$0xf]
    %v198 = vld [vmem:[#allocation5 + $0x18] sm:$0xf]
    %v199 = vld [vmem:[#allocation5 + $0x1c] sm:$0xf]
    %v200 = vld [vmem:[%s6] sm:$0x1]
    %v202 = vlaneseq
    %v203 = vshrl.u32 %v202, 7
    %v204 = vsub.s32 0, %v203
    %v205 = vrot.slane %v200, %v204
    %v215 = vunpack.c.l.b16 %v192
    %v216 = vunpack.c.l.b16 %v193
    %v217 = vunpack.c.l.b16 %v194
    %v218 = vunpack.c.l.b16 %v195
    %v219 = vunpack.c.l.b16 %v196
    %v220 = vunpack.c.l.b16 %v197
    %v221 = vunpack.c.l.b16 %v198
    %v222 = vunpack.c.l.b16 %v199
    %v223 = vpack.c.b16 %v216, %v215
    %v224 = vpack.c.b16 %v218, %v217
    %v225 = vpack.c.b16 %v220, %v219
    %v226 = vpack.c.b16 %v222, %v221
    %v232 = vsel %vm100, %v188, 0
    %v235 = vsel %vm100, %v189, 0
    %v238 = vsel %vm100, %v190, 0
    %v241 = vsel %vm100, %v191, 0
    %243 = vmatprep.subr.bf16.mxu0 0
    %244 = vmatpush1.bf16.msra.mxu0 0
    %245 = vmatprep.subr.bf16.mxu0 0
    %246 = vmatpush1.bf16.msra.mxu0 0
    %247 = vmatprep.subr.bf16.mxu0 0
    %248 = vmatpush1.bf16.msra.mxu0 0
    %249 = vmatprep.subr.bf16.mxu0 0
    %250 = vmatpush1.bf16.msra.mxu0 0
    %251 = vmatprep.subr.bf16.mxu0 0
    %252 = vmatpush1.bf16.msra.mxu0 %v226
    %253 = vmatprep.subr.bf16.mxu0 0
    %254 = vmatpush1.bf16.msra.mxu0 %v225
    %255 = vmatprep.subr.bf16.mxu0 0
    %256 = vmatpush1.bf16.msra.mxu0 %v224
    %257 = vmatprep.subr.bf16.mxu0 0
    %258 = vmatpush1.bf16.msra.mxu0 %v223
    %259 = vmatprep.subr.bf16.mxu0 0
    %260 = vmatpush2.bf16.msra.mxu0 0
    %261 = vmatprep.subr.bf16.mxu0 0
    %262 = vmatpush2.bf16.msra.mxu0 0
    %263 = vmatprep.subr.bf16.mxu0 0
    %264 = vmatpush2.bf16.msra.mxu0 0
    %265 = vmatprep.subr.bf16.mxu0 0
    %266 = vmatpush2.bf16.msra.mxu0 0
    %267 = vmatprep.subr.bf16.mxu0 0
    %268 = vmatpush2.bf16.msra.mxu0 0
    %269 = vmatprep.subr.bf16.mxu0 0
    %270 = vmatpush2.bf16.msra.mxu0 0
    %271 = vmatprep.subr.bf16.mxu0 0
    %272 = vmatpush2.bf16.msra.mxu0 0
    %273 = vmatprep.subr.bf16.mxu0 0
    %274 = vmatpush2.bf16.msra.mxu0 0
    %275 = vmatprep.mubr.bf16.mxu0 0
    %276 = vmatmul.mubr.bf16.gmra.mxu0 %v232
    %v277 = vpop.f32.mrf.mxu0
    %v278 = vadd.f32 %v205, %v277
    %v279 = vpop.f32.mrf.mxu0
    %v280 = vpop.f32.mrf.mxu0
    %v281 = vadd.f32 %v205, %v280
    %v282 = vpop.f32.mrf.mxu0
    %283 = vmatprep.mubr.bf16.mxu0 0
    %284 = vmatmul.mubr.bf16.gmra.mxu0 %v235
    %v285 = vpop.f32.mrf.mxu0
    %v286 = vadd.f32 %v205, %v285
    %v287 = vpop.f32.mrf.mxu0
    %v288 = vpop.f32.mrf.mxu0
    %v289 = vadd.f32 %v205, %v288
    %v290 = vpop.f32.mrf.mxu0
    %291 = vmatprep.mubr.bf16.mxu0 0
    %292 = vmatmul.mubr.bf16.gmra.mxu0 %v238
    %v293 = vpop.f32.mrf.mxu0
    %v294 = vadd.f32 %v205, %v293
    %v295 = vpop.f32.mrf.mxu0
    %v296 = vpop.f32.mrf.mxu0
    %v297 = vadd.f32 %v205, %v296
    %v298 = vpop.f32.mrf.mxu0
    %299 = vmatprep.mubr.bf16.mxu0 0
    %300 = vmatmul.mubr.bf16.gmra.mxu0 %v241
    %v301 = vpop.f32.mrf.mxu0
    %v302 = vadd.f32 %v205, %v301
    %v303 = vpop.f32.mrf.mxu0
    %v304 = vpop.f32.mrf.mxu0
    %v305 = vadd.f32 %v205, %v304
    %v306 = vpop.f32.mrf.mxu0
    %307 = vdwg.mxu0
    %v308 = vld [vmem:[%s5] sm:$0xf]
    %v309 = vld [vmem:[%s5 + $0x4] sm:$0xf]
    %v310 = vld [vmem:[%s5 + $0x8] sm:$0xf]
    %v311 = vld [vmem:[%s5 + $0xc] sm:$0xf]
    %v312 = vld [vmem:[#allocation7] sm:$0xf]
    %v313 = vld [vmem:[#allocation7 + $0x4] sm:$0xf]
    %v314 = vld [vmem:[#allocation7 + $0x8] sm:$0xf]
    %v315 = vld [vmem:[#allocation7 + $0xc] sm:$0xf]
    %v316 = vld [vmem:[#allocation8] sm:$0xf]
    %v317 = vld [vmem:[#allocation8 + $0x4] sm:$0xf]
    %v318 = vld [vmem:[#allocation8 + $0x8] sm:$0xf]
    %v319 = vld [vmem:[#allocation8 + $0xc] sm:$0xf]
    %v320 = vld [vmem:[%s9] sm:$0x1]
    %v321 = vld [vmem:[%s3] sm:$0xff]
    %322 = vset.pattern.permute.xlu0 0
    %323 = vperm.xlu0 %322, %v321
    %v324 = vpop.permute.xlu0 %323
    %vm325 = vcmp.gt.s32.totalorder %v324, 0
    %v330 = vunpack.c.l.b16 %v308
    %v331 = vunpack.c.l.b16 %v309
    %v332 = vunpack.c.l.b16 %v310
    %v333 = vunpack.c.l.b16 %v311
    %v334 = vpack.c.b16 %v331, %v330
    %v335 = vpack.c.b16 %v333, %v332
    %vm338 = vcmask 261120
    %v340 = vsel %vm338, 0, 0
    %342 = vmatprep.subr.bf16.mxu0 0
    %343 = vmatpush1.bf16.msra.mxu0 0
    %344 = vmatprep.subr.bf16.mxu0 0
    %345 = vmatpush1.bf16.msra.mxu0 0
    %346 = vmatprep.subr.bf16.mxu0 0
    %347 = vmatpush1.bf16.msra.mxu0 0
    %348 = vmatprep.subr.bf16.mxu0 0
    %349 = vmatpush1.bf16.msra.mxu0 0
    %350 = vmatprep.subr.bf16.mxu0 0
    %351 = vmatpush1.bf16.msra.mxu0 0
    %352 = vmatprep.subr.bf16.mxu0 0
    %353 = vmatpush1.bf16.msra.mxu0 0
    %354 = vmatprep.subr.bf16.mxu0 0
    %355 = vmatpush1.bf16.msra.mxu0 %v335
    %356 = vmatprep.subr.bf16.mxu0 0
    %357 = vmatpush1.bf16.msra.mxu0 %v334
    %358 = vmatprep.subr.bf16.mxu0 0
    %359 = vmatpush2.bf16.msra.mxu0 0
    %360 = vmatprep.subr.bf16.mxu0 0
    %361 = vmatpush2.bf16.msra.mxu0 0
    %362 = vmatprep.subr.bf16.mxu0 0
    %363 = vmatpush2.bf16.msra.mxu0 0
    %364 = vmatprep.subr.bf16.mxu0 0
    %365 = vmatpush2.bf16.msra.mxu0 0
    %366 = vmatprep.subr.bf16.mxu0 0
    %367 = vmatpush2.bf16.msra.mxu0 0
    %368 = vmatprep.subr.bf16.mxu0 0
    %369 = vmatpush2.bf16.msra.mxu0 0
    %370 = vmatprep.subr.bf16.mxu0 0
    %371 = vmatpush2.bf16.msra.mxu0 0
    %372 = vmatprep.subr.bf16.mxu0 0
    %373 = vmatpush2.bf16.msra.mxu0 0
    %374 = vmatprep.mubr.bf16.mxu0 0
    %375 = vmatmul.mubr.bf16.gmra.mxu0 %v340
    %v376 = vpop.f32.mrf.mxu0
    %v377 = vadd.f32 0.0, %v376
    %v378 = vpop.f32.mrf.mxu0
    %v379 = vpop.f32.mrf.mxu0
    %v380 = vpop.f32.mrf.mxu0
    %381 = vdwg.mxu0
    %v382 = vadd.f32 %v278, %v377
    %v383 = vxor.u32 %v382, 2147483648
    %v384 = vmul.f32 %v383, 1.442695
    %v385 = vpow.pop %v384
    %v386 = vadd.f32 %v385, 1.0
    %v387 = vrcp.pop %v386
    %v388 = vmul.f32 1.0, %v387
    %v389 = vtanh.pop %v382
    %v390 = vmul.f32 %v388, 0.0
    %392 = vrot.lane.b32.xlu0 %v389, 64
    %v393 = vpop.permute.xlu0 %392
    %v395 = vmul.f32 %v388, %v393
    %397 = vrot.lane.b32.xlu0 %v395, 32
    %v398 = vpop.permute.xlu0 %397
    %v400 = vadd.f32 %v390, %v398
    %v401 = vtanh.pop %v400
    %403 = vrot.lane.b32.xlu0 %v401, 64
    %v404 = vpop.permute.xlu0 %403
    %v406 = vmul.f32 %v388, %v404
    %v407 = vsel %vm325, %v406, 0.0
    %v408 = vsel %vm325, %v400, 0.0
    %v409 = vpack.c.bf16 %v406, %v406
    %v414 = vunpack.c.l.b16 %v316
    %v415 = vunpack.c.l.b16 %v317
    %v416 = vunpack.c.l.b16 %v318
    %v417 = vunpack.c.l.b16 %v319
    %v418 = vpack.c.b16 %v415, %v414
    %v419 = vpack.c.b16 %v417, %v416
    %422 = vmatprep.subr.bf16.mxu0 0
    %423 = vmatpush1.bf16.msra.mxu0 0
    %424 = vmatprep.subr.bf16.mxu0 0
    %425 = vmatpush1.bf16.msra.mxu0 0
    %426 = vmatprep.subr.bf16.mxu0 0
    %427 = vmatpush1.bf16.msra.mxu0 0
    %428 = vmatprep.subr.bf16.mxu0 0
    %429 = vmatpush1.bf16.msra.mxu0 0
    %430 = vmatprep.subr.bf16.mxu0 0
    %431 = vmatpush1.bf16.msra.mxu0 0
    %432 = vmatprep.subr.bf16.mxu0 0
    %433 = vmatpush1.bf16.msra.mxu0 0
    %434 = vmatprep.subr.bf16.mxu0 0
    %435 = vmatpush1.bf16.msra.mxu0 %v419
    %436 = vmatprep.subr.bf16.mxu0 0
    %437 = vmatpush1.bf16.msra.mxu0 %v418
    %438 = vmatprep.subr.bf16.mxu0 0
    %439 = vmatpush2.bf16.msra.mxu0 0
    %440 = vmatprep.subr.bf16.mxu0 0
    %441 = vmatpush2.bf16.msra.mxu0 0
    %442 = vmatprep.subr.bf16.mxu0 0
    %443 = vmatpush2.bf16.msra.mxu0 0
    %444 = vmatprep.subr.bf16.mxu0 0
    %445 = vmatpush2.bf16.msra.mxu0 0
    %446 = vmatprep.subr.bf16.mxu0 0
    %447 = vmatpush2.bf16.msra.mxu0 0
    %448 = vmatprep.subr.bf16.mxu0 0
    %449 = vmatpush2.bf16.msra.mxu0 0
    %450 = vmatprep.subr.bf16.mxu0 0
    %451 = vmatpush2.bf16.msra.mxu0 0
    %452 = vmatprep.subr.bf16.mxu0 0
    %453 = vmatpush2.bf16.msra.mxu0 0
    %454 = vmatprep.mubr.bf16.mxu0 0
    %455 = vmatmul.mubr.bf16.gmra.mxu0 %v340
    %v456 = vpop.f32.mrf.mxu0
    %v457 = vadd.f32 0.0, %v456
    %v458 = vpop.f32.mrf.mxu0
    %v459 = vpop.f32.mrf.mxu0
    %v460 = vpop.f32.mrf.mxu0
    %461 = vdwg.mxu0
    %463 = vrot.lane.b32.xlu0 %v409, 32
    %v464 = vpop.permute.xlu0 %463
    %v469 = vunpack.c.l.b16 %v312
    %v470 = vunpack.c.l.b16 %v313
    %v471 = vunpack.c.l.b16 %v314
    %v472 = vunpack.c.l.b16 %v315
    %v473 = vpack.c.b16 %v470, %v469
    %v474 = vpack.c.b16 %v472, %v471
    %v478 = vsel %vm338, %v464, 0
    %480 = vmatprep.subr.bf16.mxu0 0
    %481 = vmatpush1.bf16.msra.mxu0 0
    %482 = vmatprep.subr.bf16.mxu0 0
    %483 = vmatpush1.bf16.msra.mxu0 0
    %484 = vmatprep.subr.bf16.mxu0 0
    %485 = vmatpush1.bf16.msra.mxu0 0
    %486 = vmatprep.subr.bf16.mxu0 0
    %487 = vmatpush1.bf16.msra.mxu0 0
    %488 = vmatprep.subr.bf16.mxu0 0
    %489 = vmatpush1.bf16.msra.mxu0 0
    %490 = vmatprep.subr.bf16.mxu0 0
    %491 = vmatpush1.bf16.msra.mxu0 0
    %492 = vmatprep.subr.bf16.mxu0 0
    %493 = vmatpush1.bf16.msra.mxu0 %v474
    %494 = vmatprep.subr.bf16.mxu0 0
    %495 = vmatpush1.bf16.msra.mxu0 %v473
    %496 = vmatprep.subr.bf16.mxu0 0
    %497 = vmatpush2.bf16.msra.mxu0 0
    %498 = vmatprep.subr.bf16.mxu0 0
    %499 = vmatpush2.bf16.msra.mxu0 0
    %500 = vmatprep.subr.bf16.mxu0 0
    %501 = vmatpush2.bf16.msra.mxu0 0
    %502 = vmatprep.subr.bf16.mxu0 0
    %503 = vmatpush2.bf16.msra.mxu0 0
    %504 = vmatprep.subr.bf16.mxu0 0
    %505 = vmatpush2.bf16.msra.mxu0 0
    %506 = vmatprep.subr.bf16.mxu0 0
    %507 = vmatpush2.bf16.msra.mxu0 0
    %508 = vmatprep.subr.bf16.mxu0 0
    %509 = vmatpush2.bf16.msra.mxu0 0
    %510 = vmatprep.subr.bf16.mxu0 0
    %511 = vmatpush2.bf16.msra.mxu0 0
    %512 = vmatprep.mubr.bf16.mxu0 0
    %513 = vmatmul.mubr.bf16.gmra.mxu0 %v478
    %v514 = vpop.f32.mrf.mxu0
    %v515 = vadd.f32 %v457, %v514
    %v516 = vpop.f32.mrf.mxu0
    %v517 = vpop.f32.mrf.mxu0
    %v518 = vpop.f32.mrf.mxu0
    %519 = vdwg.mxu0
    %v521 = vlaneseq
    %v522 = vshrl.u32 %v521, 7
    %v523 = vsub.s32 0, %v522
    %v524 = vrot.slane %v320, %v523
    %v526 = vadd.f32 %v515, %v524
    %v527 = vxor.u32 %v526, 2147483648
    %v528 = vmul.f32 %v527, 1.442695
    %v529 = vpow.pop %v528
    %v530 = vadd.f32 %v529, 1.0
    %v531 = vrcp.pop %v530
    %v532 = vmul.f32 1.0, %v531
    %v533 = vtanh.pop %v526
    %v534 = vmul.f32 %v532, 0.0
    %536 = vrot.lane.b32.xlu0 %v533, 64
    %v537 = vpop.permute.xlu0 %536
    %v539 = vmul.f32 %v532, %v537
    %541 = vrot.lane.b32.xlu0 %v539, 32
    %v542 = vpop.permute.xlu0 %541
    %v544 = vadd.f32 %v534, %v542
    %v545 = vtanh.pop %v544
    %547 = vrot.lane.b32.xlu0 %v545, 64
    %v548 = vpop.permute.xlu0 %547
    %v550 = vmul.f32 %v532, %v548
    %v551 = vsel %vm325, %v550, 0.0
    %v552 = vsel %vm325, %v544, 0.0
    %vm553 = vcmp.gt.s32.totalorder %v324, 1
    %v554 = vpack.c.bf16 %v407, %v407
    %556 = vrot.lane.b32.xlu0 %v554, 32
    %v557 = vpop.permute.xlu0 %556
    %v559 = vsel %vm338, %v557, 0
    %561 = vmatprep.subr.bf16.mxu0 0
    %562 = vmatpush1.bf16.msra.mxu0 0
    %563 = vmatprep.subr.bf16.mxu0 0
    %564 = vmatpush1.bf16.msra.mxu0 0
    %565 = vmatprep.subr.bf16.mxu0 0
    %566 = vmatpush1.bf16.msra.mxu0 0
    %567 = vmatprep.subr.bf16.mxu0 0
    %568 = vmatpush1.bf16.msra.mxu0 0
    %569 = vmatprep.subr.bf16.mxu0 0
    %570 = vmatpush1.bf16.msra.mxu0 0
    %571 = vmatprep.subr.bf16.mxu0 0
    %572 = vmatpush1.bf16.msra.mxu0 0
    %573 = vmatprep.subr.bf16.mxu0 0
    %574 = vmatpush1.bf16.msra.mxu0 %v335
    %575 = vmatprep.subr.bf16.mxu0 0
    %576 = vmatpush1.bf16.msra.mxu0 %v334
    %577 = vmatprep.subr.bf16.mxu0 0
    %578 = vmatpush2.bf16.msra.mxu0 0
    %579 = vmatprep.subr.bf16.mxu0 0
    %580 = vmatpush2.bf16.msra.mxu0 0
    %581 = vmatprep.subr.bf16.mxu0 0
    %582 = vmatpush2.bf16.msra.mxu0 0
    %583 = vmatprep.subr.bf16.mxu0 0
    %584 = vmatpush2.bf16.msra.mxu0 0
    %585 = vmatprep.subr.bf16.mxu0 0
    %586 = vmatpush2.bf16.msra.mxu0 0
    %587 = vmatprep.subr.bf16.mxu0 0
    %588 = vmatpush2.bf16.msra.mxu0 0
    %589 = vmatprep.subr.bf16.mxu0 0
    %590 = vmatpush2.bf16.msra.mxu0 0
    %591 = vmatprep.subr.bf16.mxu0 0
    %592 = vmatpush2.bf16.msra.mxu0 0
    %593 = vmatprep.mubr.bf16.mxu0 0
    %594 = vmatmul.mubr.bf16.gmra.mxu0 %v559
    %v595 = vpop.f32.mrf.mxu0
    %v596 = vadd.f32 0.0, %v595
    %v597 = vpop.f32.mrf.mxu0
    %v598 = vpop.f32.mrf.mxu0
    %v599 = vpop.f32.mrf.mxu0
    %600 = vdwg.mxu0
    %v601 = vadd.f32 %v281, %v596
    %v602 = vxor.u32 %v601, 2147483648
    %v603 = vmul.f32 %v602, 1.442695
    %v604 = vpow.pop %v603
    %v605 = vadd.f32 %v604, 1.0
    %v606 = vrcp.pop %v605
    %v607 = vmul.f32 1.0, %v606
    %v608 = vtanh.pop %v601
    %v609 = vmul.f32 %v607, %v408
    %611 = vrot.lane.b32.xlu0 %v608, 64
    %v612 = vpop.permute.xlu0 %611
    %v614 = vmul.f32 %v607, %v612
    %616 = vrot.lane.b32.xlu0 %v614, 32
    %v617 = vpop.permute.xlu0 %616
    %v619 = vadd.f32 %v609, %v617
    %v620 = vtanh.pop %v619
    %622 = vrot.lane.b32.xlu0 %v620, 64
    %v623 = vpop.permute.xlu0 %622
    %v625 = vmul.f32 %v607, %v623
    %v626 = vsel %vm553, %v625, %v407
    %v627 = vsel %vm553, %v619, %v408
    %v628 = vpack.c.bf16 %v625, %v625
    %v629 = vpack.c.bf16 %v551, %v551
    %631 = vrot.lane.b32.xlu0 %v629, 32
    %v632 = vpop.permute.xlu0 %631
    %v634 = vsel %vm338, %v632, 0
    %636 = vmatprep.subr.bf16.mxu0 0
    %637 = vmatpush1.bf16.msra.mxu0 0
    %638 = vmatprep.subr.bf16.mxu0 0
    %639 = vmatpush1.bf16.msra.mxu0 0
    %640 = vmatprep.subr.bf16.mxu0 0
    %641 = vmatpush1.bf16.msra.mxu0 0
    %642 = vmatprep.subr.bf16.mxu0 0
    %643 = vmatpush1.bf16.msra.mxu0 0
    %644 = vmatprep.subr.bf16.mxu0 0
    %645 = vmatpush1.bf16.msra.mxu0 0
    %646 = vmatprep.subr.bf16.mxu0 0
    %647 = vmatpush1.bf16.msra.mxu0 0
    %648 = vmatprep.subr.bf16.mxu0 0
    %649 = vmatpush1.bf16.msra.mxu0 %v419
    %650 = vmatprep.subr.bf16.mxu0 0
    %651 = vmatpush1.bf16.msra.mxu0 %v418
    %652 = vmatprep.subr.bf16.mxu0 0
    %653 = vmatpush2.bf16.msra.mxu0 0
    %654 = vmatprep.subr.bf16.mxu0 0
    %655 = vmatpush2.bf16.msra.mxu0 0
    %656 = vmatprep.subr.bf16.mxu0 0
    %657 = vmatpush2.bf16.msra.mxu0 0
    %658 = vmatprep.subr.bf16.mxu0 0
    %659 = vmatpush2.bf16.msra.mxu0 0
    %660 = vmatprep.subr.bf16.mxu0 0
    %661 = vmatpush2.bf16.msra.mxu0 0
    %662 = vmatprep.subr.bf16.mxu0 0
    %663 = vmatpush2.bf16.msra.mxu0 0
    %664 = vmatprep.subr.bf16.mxu0 0
    %665 = vmatpush2.bf16.msra.mxu0 0
    %666 = vmatprep.subr.bf16.mxu0 0
    %667 = vmatpush2.bf16.msra.mxu0 0
    %668 = vmatprep.mubr.bf16.mxu0 0
    %669 = vmatmul.mubr.bf16.gmra.mxu0 %v634
    %v670 = vpop.f32.mrf.mxu0
    %v671 = vadd.f32 0.0, %v670
    %v672 = vpop.f32.mrf.mxu0
    %v673 = vpop.f32.mrf.mxu0
    %v674 = vpop.f32.mrf.mxu0
    %675 = vdwg.mxu0
    %677 = vrot.lane.b32.xlu0 %v628, 32
    %v678 = vpop.permute.xlu0 %677
    %v680 = vsel %vm338, %v678, 0
    %682 = vmatprep.subr.bf16.mxu0 0
    %683 = vmatpush1.bf16.msra.mxu0 0
    %684 = vmatprep.subr.bf16.mxu0 0
    %685 = vmatpush1.bf16.msra.mxu0 0
    %686 = vmatprep.subr.bf16.mxu0 0
    %687 = vmatpush1.bf16.msra.mxu0 0
    %688 = vmatprep.subr.bf16.mxu0 0
    %689 = vmatpush1.bf16.msra.mxu0 0
    %690 = vmatprep.subr.bf16.mxu0 0
    %691 = vmatpush1.bf16.msra.mxu0 0
    %692 = vmatprep.subr.bf16.mxu0 0
    %693 = vmatpush1.bf16.msra.mxu0 0
    %694 = vmatprep.subr.bf16.mxu0 0
    %695 = vmatpush1.bf16.msra.mxu0 %v474
    %696 = vmatprep.subr.bf16.mxu0 0
    %697 = vmatpush1.bf16.msra.mxu0 %v473
    %698 = vmatprep.subr.bf16.mxu0 0
    %699 = vmatpush2.bf16.msra.mxu0 0
    %700 = vmatprep.subr.bf16.mxu0 0
    %701 = vmatpush2.bf16.msra.mxu0 0
    %702 = vmatprep.subr.bf16.mxu0 0
    %703 = vmatpush2.bf16.msra.mxu0 0
    %704 = vmatprep.subr.bf16.mxu0 0
    %705 = vmatpush2.bf16.msra.mxu0 0
    %706 = vmatprep.subr.bf16.mxu0 0
    %707 = vmatpush2.bf16.msra.mxu0 0
    %708 = vmatprep.subr.bf16.mxu0 0
    %709 = vmatpush2.bf16.msra.mxu0 0
    %710 = vmatprep.subr.bf16.mxu0 0
    %711 = vmatpush2.bf16.msra.mxu0 0
    %712 = vmatprep.subr.bf16.mxu0 0
    %713 = vmatpush2.bf16.msra.mxu0 0
    %714 = vmatprep.mubr.bf16.mxu0 0
    %715 = vmatmul.mubr.bf16.gmra.mxu0 %v680
    %v716 = vpop.f32.mrf.mxu0
    %v717 = vadd.f32 %v671, %v716
    %v718 = vpop.f32.mrf.mxu0
    %v719 = vpop.f32.mrf.mxu0
    %v720 = vpop.f32.mrf.mxu0
    %721 = vdwg.mxu0
    %v722 = vadd.f32 %v717, %v524
    %v723 = vxor.u32 %v722, 2147483648
    %v724 = vmul.f32 %v723, 1.442695
    %v725 = vpow.pop %v724
    %v726 = vadd.f32 %v725, 1.0
    %v727 = vrcp.pop %v726
    %v728 = vmul.f32 1.0, %v727
    %v729 = vtanh.pop %v722
    %v730 = vmul.f32 %v728, %v552
    %732 = vrot.lane.b32.xlu0 %v729, 64
    %v733 = vpop.permute.xlu0 %732
    %v735 = vmul.f32 %v728, %v733
    %737 = vrot.lane.b32.xlu0 %v735, 32
    %v738 = vpop.permute.xlu0 %737
    %v740 = vadd.f32 %v730, %v738
    %v741 = vtanh.pop %v740
    %743 = vrot.lane.b32.xlu0 %v741, 64
    %v744 = vpop.permute.xlu0 %743
    %v746 = vmul.f32 %v728, %v744
    %v747 = vsel %vm553, %v746, %v551
    %v748 = vsel %vm553, %v740, %v552
    %vm749 = vcmp.gt.s32.totalorder %v324, 2
    %v750 = vpack.c.bf16 %v626, %v626
    %752 = vrot.lane.b32.xlu0 %v750, 32
    %v753 = vpop.permute.xlu0 %752
    %v755 = vsel %vm338, %v753, 0
    %757 = vmatprep.subr.bf16.mxu0 0
    %758 = vmatpush1.bf16.msra.mxu0 0
    %759 = vmatprep.subr.bf16.mxu0 0
    %760 = vmatpush1.bf16.msra.mxu0 0
    %761 = vmatprep.subr.bf16.mxu0 0
    %762 = vmatpush1.bf16.msra.mxu0 0
    %763 = vmatprep.subr.bf16.mxu0 0
    %764 = vmatpush1.bf16.msra.mxu0 0
    %765 = vmatprep.subr.bf16.mxu0 0
    %766 = vmatpush1.bf16.msra.mxu0 0
    %767 = vmatprep.subr.bf16.mxu0 0
    %768 = vmatpush1.bf16.msra.mxu0 0
    %769 = vmatprep.subr.bf16.mxu0 0
    %770 = vmatpush1.bf16.msra.mxu0 %v335
    %771 = vmatprep.subr.bf16.mxu0 0
    %772 = vmatpush1.bf16.msra.mxu0 %v334
    %773 = vmatprep.subr.bf16.mxu0 0
    %774 = vmatpush2.bf16.msra.mxu0 0
    %775 = vmatprep.subr.bf16.mxu0 0
    %776 = vmatpush2.bf16.msra.mxu0 0
    %777 = vmatprep.subr.bf16.mxu0 0
    %778 = vmatpush2.bf16.msra.mxu0 0
    %779 = vmatprep.subr.bf16.mxu0 0
    %780 = vmatpush2.bf16.msra.mxu0 0
    %781 = vmatprep.subr.bf16.mxu0 0
    %782 = vmatpush2.bf16.msra.mxu0 0
    %783 = vmatprep.subr.bf16.mxu0 0
    %784 = vmatpush2.bf16.msra.mxu0 0
    %785 = vmatprep.subr.bf16.mxu0 0
    %786 = vmatpush2.bf16.msra.mxu0 0
    %787 = vmatprep.subr.bf16.mxu0 0
    %788 = vmatpush2.bf16.msra.mxu0 0
    %789 = vmatprep.mubr.bf16.mxu0 0
    %790 = vmatmul.mubr.bf16.gmra.mxu0 %v755
    %v791 = vpop.f32.mrf.mxu0
    %v792 = vadd.f32 0.0, %v791
    %v793 = vpop.f32.mrf.mxu0
    %v794 = vpop.f32.mrf.mxu0
    %v795 = vpop.f32.mrf.mxu0
    %796 = vdwg.mxu0
    %v797 = vadd.f32 %v286, %v792
    %v798 = vxor.u32 %v797, 2147483648
    %v799 = vmul.f32 %v798, 1.442695
    %v800 = vpow.pop %v799
    %v801 = vadd.f32 %v800, 1.0
    %v802 = vrcp.pop %v801
    %v803 = vmul.f32 1.0, %v802
    %v804 = vtanh.pop %v797
    %v805 = vmul.f32 %v803, %v627
    %807 = vrot.lane.b32.xlu0 %v804, 64
    %v808 = vpop.permute.xlu0 %807
    %v810 = vmul.f32 %v803, %v808
    %812 = vrot.lane.b32.xlu0 %v810, 32
    %v813 = vpop.permute.xlu0 %812
    %v815 = vadd.f32 %v805, %v813
    %v816 = vtanh.pop %v815
    %818 = vrot.lane.b32.xlu0 %v816, 64
    %v819 = vpop.permute.xlu0 %818
    %v821 = vmul.f32 %v803, %v819
    %v822 = vsel %vm749, %v821, %v626
    %v823 = vsel %vm749, %v815, %v627
    %v824 = vpack.c.bf16 %v821, %v821
    %v825 = vpack.c.bf16 %v747, %v747
    %827 = vrot.lane.b32.xlu0 %v825, 32
    %v828 = vpop.permute.xlu0 %827
    %v830 = vsel %vm338, %v828, 0
    %832 = vmatprep.subr.bf16.mxu0 0
    %833 = vmatpush1.bf16.msra.mxu0 0
    %834 = vmatprep.subr.bf16.mxu0 0
    %835 = vmatpush1.bf16.msra.mxu0 0
    %836 = vmatprep.subr.bf16.mxu0 0
    %837 = vmatpush1.bf16.msra.mxu0 0
    %838 = vmatprep.subr.bf16.mxu0 0
    %839 = vmatpush1.bf16.msra.mxu0 0
    %840 = vmatprep.subr.bf16.mxu0 0
    %841 = vmatpush1.bf16.msra.mxu0 0
    %842 = vmatprep.subr.bf16.mxu0 0
    %843 = vmatpush1.bf16.msra.mxu0 0
    %844 = vmatprep.subr.bf16.mxu0 0
    %845 = vmatpush1.bf16.msra.mxu0 %v419
    %846 = vmatprep.subr.bf16.mxu0 0
    %847 = vmatpush1.bf16.msra.mxu0 %v418
    %848 = vmatprep.subr.bf16.mxu0 0
    %849 = vmatpush2.bf16.msra.mxu0 0
    %850 = vmatprep.subr.bf16.mxu0 0
    %851 = vmatpush2.bf16.msra.mxu0 0
    %852 = vmatprep.subr.bf16.mxu0 0
    %853 = vmatpush2.bf16.msra.mxu0 0
    %854 = vmatprep.subr.bf16.mxu0 0
    %855 = vmatpush2.bf16.msra.mxu0 0
    %856 = vmatprep.subr.bf16.mxu0 0
    %857 = vmatpush2.bf16.msra.mxu0 0
    %858 = vmatprep.subr.bf16.mxu0 0
    %859 = vmatpush2.bf16.msra.mxu0 0
    %860 = vmatprep.subr.bf16.mxu0 0
    %861 = vmatpush2.bf16.msra.mxu0 0
    %862 = vmatprep.subr.bf16.mxu0 0
    %863 = vmatpush2.bf16.msra.mxu0 0
    %864 = vmatprep.mubr.bf16.mxu0 0
    %865 = vmatmul.mubr.bf16.gmra.mxu0 %v830
    %v866 = vpop.f32.mrf.mxu0
    %v867 = vadd.f32 0.0, %v866
    %v868 = vpop.f32.mrf.mxu0
    %v869 = vpop.f32.mrf.mxu0
    %v870 = vpop.f32.mrf.mxu0
    %871 = vdwg.mxu0
    %873 = vrot.lane.b32.xlu0 %v824, 32
    %v874 = vpop.permute.xlu0 %873
    %v876 = vsel %vm338, %v874, 0
    %878 = vmatprep.subr.bf16.mxu0 0
    %879 = vmatpush1.bf16.msra.mxu0 0
    %880 = vmatprep.subr.bf16.mxu0 0
    %881 = vmatpush1.bf16.msra.mxu0 0
    %882 = vmatprep.subr.bf16.mxu0 0
    %883 = vmatpush1.bf16.msra.mxu0 0
    %884 = vmatprep.subr.bf16.mxu0 0
    %885 = vmatpush1.bf16.msra.mxu0 0
    %886 = vmatprep.subr.bf16.mxu0 0
    %887 = vmatpush1.bf16.msra.mxu0 0
    %888 = vmatprep.subr.bf16.mxu0 0
    %889 = vmatpush1.bf16.msra.mxu0 0
    %890 = vmatprep.subr.bf16.mxu0 0
    %891 = vmatpush1.bf16.msra.mxu0 %v474
    %892 = vmatprep.subr.bf16.mxu0 0
    %893 = vmatpush1.bf16.msra.mxu0 %v473
    %894 = vmatprep.subr.bf16.mxu0 0
    %895 = vmatpush2.bf16.msra.mxu0 0
    %896 = vmatprep.subr.bf16.mxu0 0
    %897 = vmatpush2.bf16.msra.mxu0 0
    %898 = vmatprep.subr.bf16.mxu0 0
    %899 = vmatpush2.bf16.msra.mxu0 0
    %900 = vmatprep.subr.bf16.mxu0 0
    %901 = vmatpush2.bf16.msra.mxu0 0
    %902 = vmatprep.subr.bf16.mxu0 0
    %903 = vmatpush2.bf16.msra.mxu0 0
    %904 = vmatprep.subr.bf16.mxu0 0
    %905 = vmatpush2.bf16.msra.mxu0 0
    %906 = vmatprep.subr.bf16.mxu0 0
    %907 = vmatpush2.bf16.msra.mxu0 0
    %908 = vmatprep.subr.bf16.mxu0 0
    %909 = vmatpush2.bf16.msra.mxu0 0
    %910 = vmatprep.mubr.bf16.mxu0 0
    %911 = vmatmul.mubr.bf16.gmra.mxu0 %v876
    %v912 = vpop.f32.mrf.mxu0
    %v913 = vadd.f32 %v867, %v912
    %v914 = vpop.f32.mrf.mxu0
    %v915 = vpop.f32.mrf.mxu0
    %v916 = vpop.f32.mrf.mxu0
    %917 = vdwg.mxu0
    %v918 = vadd.f32 %v913, %v524
    %v919 = vxor.u32 %v918, 2147483648
    %v920 = vmul.f32 %v919, 1.442695
    %v921 = vpow.pop %v920
    %v922 = vadd.f32 %v921, 1.0
    %v923 = vrcp.pop %v922
    %v924 = vmul.f32 1.0, %v923
    %v925 = vtanh.pop %v918
    %v926 = vmul.f32 %v924, %v748
    %928 = vrot.lane.b32.xlu0 %v925, 64
    %v929 = vpop.permute.xlu0 %928
    %v931 = vmul.f32 %v924, %v929
    %933 = vrot.lane.b32.xlu0 %v931, 32
    %v934 = vpop.permute.xlu0 %933
    %v936 = vadd.f32 %v926, %v934
    %v937 = vtanh.pop %v936
    %939 = vrot.lane.b32.xlu0 %v937, 64
    %v940 = vpop.permute.xlu0 %939
    %v942 = vmul.f32 %v924, %v940
    %v943 = vsel %vm749, %v942, %v747
    %v944 = vsel %vm749, %v936, %v748
    %vm945 = vcmp.gt.s32.totalorder %v324, 3
    %v946 = vpack.c.bf16 %v822, %v822
    %948 = vrot.lane.b32.xlu0 %v946, 32
    %v949 = vpop.permute.xlu0 %948
    %v951 = vsel %vm338, %v949, 0
    %953 = vmatprep.subr.bf16.mxu0 0
    %954 = vmatpush1.bf16.msra.mxu0 0
    %955 = vmatprep.subr.bf16.mxu0 0
    %956 = vmatpush1.bf16.msra.mxu0 0
    %957 = vmatprep.subr.bf16.mxu0 0
    %958 = vmatpush1.bf16.msra.mxu0 0
    %959 = vmatprep.subr.bf16.mxu0 0
    %960 = vmatpush1.bf16.msra.mxu0 0
    %961 = vmatprep.subr.bf16.mxu0 0
    %962 = vmatpush1.bf16.msra.mxu0 0
    %963 = vmatprep.subr.bf16.mxu0 0
    %964 = vmatpush1.bf16.msra.mxu0 0
    %965 = vmatprep.subr.bf16.mxu0 0
    %966 = vmatpush1.bf16.msra.mxu0 %v335
    %967 = vmatprep.subr.bf16.mxu0 0
    %968 = vmatpush1.bf16.msra.mxu0 %v334
    %969 = vmatprep.subr.bf16.mxu0 0
    %970 = vmatpush2.bf16.msra.mxu0 0
    %971 = vmatprep.subr.bf16.mxu0 0
    %972 = vmatpush2.bf16.msra.mxu0 0
    %973 = vmatprep.subr.bf16.mxu0 0
    %974 = vmatpush2.bf16.msra.mxu0 0
    %975 = vmatprep.subr.bf16.mxu0 0
    %976 = vmatpush2.bf16.msra.mxu0 0
    %977 = vmatprep.subr.bf16.mxu0 0
    %978 = vmatpush2.bf16.msra.mxu0 0
    %979 = vmatprep.subr.bf16.mxu0 0
    %980 = vmatpush2.bf16.msra.mxu0 0
    %981 = vmatprep.subr.bf16.mxu0 0
    %982 = vmatpush2.bf16.msra.mxu0 0
    %983 = vmatprep.subr.bf16.mxu0 0
    %984 = vmatpush2.bf16.msra.mxu0 0
    %985 = vmatprep.mubr.bf16.mxu0 0
    %986 = vmatmul.mubr.bf16.gmra.mxu0 %v951
    %v987 = vpop.f32.mrf.mxu0
    %v988 = vadd.f32 0.0, %v987
    %v989 = vpop.f32.mrf.mxu0
    %v990 = vpop.f32.mrf.mxu0
    %v991 = vpop.f32.mrf.mxu0
    %992 = vdwg.mxu0
    %v993 = vadd.f32 %v289, %v988
    %v994 = vxor.u32 %v993, 2147483648
    %v995 = vmul.f32 %v994, 1.442695
    %v996 = vpow.pop %v995
    %v997 = vadd.f32 %v996, 1.0
    %v998 = vrcp.pop %v997
    %v999 = vmul.f32 1.0, %v998
    %v1000 = vtanh.pop %v993
    %v1001 = vmul.f32 %v999, %v823
    %1003 = vrot.lane.b32.xlu0 %v1000, 64
    %v1004 = vpop.permute.xlu0 %1003
    %v1006 = vmul.f32 %v999, %v1004
    %1008 = vrot.lane.b32.xlu0 %v1006, 32
    %v1009 = vpop.permute.xlu0 %1008
    %v1011 = vadd.f32 %v1001, %v1009
    %v1012 = vtanh.pop %v1011
    %1014 = vrot.lane.b32.xlu0 %v1012, 64
    %v1015 = vpop.permute.xlu0 %1014
    %v1017 = vmul.f32 %v999, %v1015
    %v1018 = vsel %vm945, %v1017, %v822
    %v1019 = vsel %vm945, %v1011, %v823
    %v1020 = vpack.c.bf16 %v1017, %v1017
    %v1021 = vpack.c.bf16 %v943, %v943
    %1023 = vrot.lane.b32.xlu0 %v1021, 32
    %v1024 = vpop.permute.xlu0 %1023
    %v1026 = vsel %vm338, %v1024, 0
    %1028 = vmatprep.subr.bf16.mxu0 0
    %1029 = vmatpush1.bf16.msra.mxu0 0
    %1030 = vmatprep.subr.bf16.mxu0 0
    %1031 = vmatpush1.bf16.msra.mxu0 0
    %1032 = vmatprep.subr.bf16.mxu0 0
    %1033 = vmatpush1.bf16.msra.mxu0 0
    %1034 = vmatprep.subr.bf16.mxu0 0
    %1035 = vmatpush1.bf16.msra.mxu0 0
    %1036 = vmatprep.subr.bf16.mxu0 0
    %1037 = vmatpush1.bf16.msra.mxu0 0
    %1038 = vmatprep.subr.bf16.mxu0 0
    %1039 = vmatpush1.bf16.msra.mxu0 0
    %1040 = vmatprep.subr.bf16.mxu0 0
    %1041 = vmatpush1.bf16.msra.mxu0 %v419
    %1042 = vmatprep.subr.bf16.mxu0 0
    %1043 = vmatpush1.bf16.msra.mxu0 %v418
    %1044 = vmatprep.subr.bf16.mxu0 0
    %1045 = vmatpush2.bf16.msra.mxu0 0
    %1046 = vmatprep.subr.bf16.mxu0 0
    %1047 = vmatpush2.bf16.msra.mxu0 0
    %1048 = vmatprep.subr.bf16.mxu0 0
    %1049 = vmatpush2.bf16.msra.mxu0 0
    %1050 = vmatprep.subr.bf16.mxu0 0
    %1051 = vmatpush2.bf16.msra.mxu0 0
    %1052 = vmatprep.subr.bf16.mxu0 0
    %1053 = vmatpush2.bf16.msra.mxu0 0
    %1054 = vmatprep.subr.bf16.mxu0 0
    %1055 = vmatpush2.bf16.msra.mxu0 0
    %1056 = vmatprep.subr.bf16.mxu0 0
    %1057 = vmatpush2.bf16.msra.mxu0 0
    %1058 = vmatprep.subr.bf16.mxu0 0
    %1059 = vmatpush2.bf16.msra.mxu0 0
    %1060 = vmatprep.mubr.bf16.mxu0 0
    %1061 = vmatmul.mubr.bf16.gmra.mxu0 %v1026
    %v1062 = vpop.f32.mrf.mxu0
    %v1063 = vadd.f32 0.0, %v1062
    %v1064 = vpop.f32.mrf.mxu0
    %v1065 = vpop.f32.mrf.mxu0
    %v1066 = vpop.f32.mrf.mxu0
    %1067 = vdwg.mxu0
    %1069 = vrot.lane.b32.xlu0 %v1020, 32
    %v1070 = vpop.permute.xlu0 %1069
    %v1072 = vsel %vm338, %v1070, 0
    %1074 = vmatprep.subr.bf16.mxu0 0
    %1075 = vmatpush1.bf16.msra.mxu0 0
    %1076 = vmatprep.subr.bf16.mxu0 0
    %1077 = vmatpush1.bf16.msra.mxu0 0
    %1078 = vmatprep.subr.bf16.mxu0 0
    %1079 = vmatpush1.bf16.msra.mxu0 0
    %1080 = vmatprep.subr.bf16.mxu0 0
    %1081 = vmatpush1.bf16.msra.mxu0 0
    %1082 = vmatprep.subr.bf16.mxu0 0
    %1083 = vmatpush1.bf16.msra.mxu0 0
    %1084 = vmatprep.subr.bf16.mxu0 0
    %1085 = vmatpush1.bf16.msra.mxu0 0
    %1086 = vmatprep.subr.bf16.mxu0 0
    %1087 = vmatpush1.bf16.msra.mxu0 %v474
    %1088 = vmatprep.subr.bf16.mxu0 0
    %1089 = vmatpush1.bf16.msra.mxu0 %v473
    %1090 = vmatprep.subr.bf16.mxu0 0
    %1091 = vmatpush2.bf16.msra.mxu0 0
    %1092 = vmatprep.subr.bf16.mxu0 0
    %1093 = vmatpush2.bf16.msra.mxu0 0
    %1094 = vmatprep.subr.bf16.mxu0 0
    %1095 = vmatpush2.bf16.msra.mxu0 0
    %1096 = vmatprep.subr.bf16.mxu0 0
    %1097 = vmatpush2.bf16.msra.mxu0 0
    %1098 = vmatprep.subr.bf16.mxu0 0
    %1099 = vmatpush2.bf16.msra.mxu0 0
    %1100 = vmatprep.subr.bf16.mxu0 0
    %1101 = vmatpush2.bf16.msra.mxu0 0
    %1102 = vmatprep.subr.bf16.mxu0 0
    %1103 = vmatpush2.bf16.msra.mxu0 0
    %1104 = vmatprep.subr.bf16.mxu0 0
    %1105 = vmatpush2.bf16.msra.mxu0 0
    %1106 = vmatprep.mubr.bf16.mxu0 0
    %1107 = vmatmul.mubr.bf16.gmra.mxu0 %v1072
    %v1108 = vpop.f32.mrf.mxu0
    %v1109 = vadd.f32 %v1063, %v1108
    %v1110 = vpop.f32.mrf.mxu0
    %v1111 = vpop.f32.mrf.mxu0
    %v1112 = vpop.f32.mrf.mxu0
    %1113 = vdwg.mxu0
    %v1114 = vadd.f32 %v1109, %v524
    %v1115 = vxor.u32 %v1114, 2147483648
    %v1116 = vmul.f32 %v1115, 1.442695
    %v1117 = vpow.pop %v1116
    %v1118 = vadd.f32 %v1117, 1.0
    %v1119 = vrcp.pop %v1118
    %v1120 = vmul.f32 1.0, %v1119
    %v1121 = vtanh.pop %v1114
    %v1122 = vmul.f32 %v1120, %v944
    %1124 = vrot.lane.b32.xlu0 %v1121, 64
    %v1125 = vpop.permute.xlu0 %1124
    %v1127 = vmul.f32 %v1120, %v1125
    %1129 = vrot.lane.b32.xlu0 %v1127, 32
    %v1130 = vpop.permute.xlu0 %1129
    %v1132 = vadd.f32 %v1122, %v1130
    %v1133 = vtanh.pop %v1132
    %1135 = vrot.lane.b32.xlu0 %v1133, 64
    %v1136 = vpop.permute.xlu0 %1135
    %v1138 = vmul.f32 %v1120, %v1136
    %v1139 = vsel %vm945, %v1138, %v943
    %v1140 = vsel %vm945, %v1132, %v944
    %vm1141 = vcmp.gt.s32.totalorder %v324, 4
    %v1142 = vpack.c.bf16 %v1018, %v1018
    %1144 = vrot.lane.b32.xlu0 %v1142, 32
    %v1145 = vpop.permute.xlu0 %1144
    %v1147 = vsel %vm338, %v1145, 0
    %1149 = vmatprep.subr.bf16.mxu0 0
    %1150 = vmatpush1.bf16.msra.mxu0 0
    %1151 = vmatprep.subr.bf16.mxu0 0
    %1152 = vmatpush1.bf16.msra.mxu0 0
    %1153 = vmatprep.subr.bf16.mxu0 0
    %1154 = vmatpush1.bf16.msra.mxu0 0
    %1155 = vmatprep.subr.bf16.mxu0 0
    %1156 = vmatpush1.bf16.msra.mxu0 0
    %1157 = vmatprep.subr.bf16.mxu0 0
    %1158 = vmatpush1.bf16.msra.mxu0 0
    %1159 = vmatprep.subr.bf16.mxu0 0
    %1160 = vmatpush1.bf16.msra.mxu0 0
    %1161 = vmatprep.subr.bf16.mxu0 0
    %1162 = vmatpush1.bf16.msra.mxu0 %v335
    %1163 = vmatprep.subr.bf16.mxu0 0
    %1164 = vmatpush1.bf16.msra.mxu0 %v334
    %1165 = vmatprep.subr.bf16.mxu0 0
    %1166 = vmatpush2.bf16.msra.mxu0 0
    %1167 = vmatprep.subr.bf16.mxu0 0
    %1168 = vmatpush2.bf16.msra.mxu0 0
    %1169 = vmatprep.subr.bf16.mxu0 0
    %1170 = vmatpush2.bf16.msra.mxu0 0
    %1171 = vmatprep.subr.bf16.mxu0 0
    %1172 = vmatpush2.bf16.msra.mxu0 0
    %1173 = vmatprep.subr.bf16.mxu0 0
    %1174 = vmatpush2.bf16.msra.mxu0 0
    %1175 = vmatprep.subr.bf16.mxu0 0
    %1176 = vmatpush2.bf16.msra.mxu0 0
    %1177 = vmatprep.subr.bf16.mxu0 0
    %1178 = vmatpush2.bf16.msra.mxu0 0
    %1179 = vmatprep.subr.bf16.mxu0 0
    %1180 = vmatpush2.bf16.msra.mxu0 0
    %1181 = vmatprep.mubr.bf16.mxu0 0
    %1182 = vmatmul.mubr.bf16.gmra.mxu0 %v1147
    %v1183 = vpop.f32.mrf.mxu0
    %v1184 = vadd.f32 0.0, %v1183
    %v1185 = vpop.f32.mrf.mxu0
    %v1186 = vpop.f32.mrf.mxu0
    %v1187 = vpop.f32.mrf.mxu0
    %1188 = vdwg.mxu0
    %v1189 = vadd.f32 %v294, %v1184
    %v1190 = vxor.u32 %v1189, 2147483648
    %v1191 = vmul.f32 %v1190, 1.442695
    %v1192 = vpow.pop %v1191
    %v1193 = vadd.f32 %v1192, 1.0
    %v1194 = vrcp.pop %v1193
    %v1195 = vmul.f32 1.0, %v1194
    %v1196 = vtanh.pop %v1189
    %v1197 = vmul.f32 %v1195, %v1019
    %1199 = vrot.lane.b32.xlu0 %v1196, 64
    %v1200 = vpop.permute.xlu0 %1199
    %v1202 = vmul.f32 %v1195, %v1200
    %1204 = vrot.lane.b32.xlu0 %v1202, 32
    %v1205 = vpop.permute.xlu0 %1204
    %v1207 = vadd.f32 %v1197, %v1205
    %v1208 = vtanh.pop %v1207
    %1210 = vrot.lane.b32.xlu0 %v1208, 64
    %v1211 = vpop.permute.xlu0 %1210
    %v1213 = vmul.f32 %v1195, %v1211
    %v1214 = vsel %vm1141, %v1213, %v1018
    %v1215 = vsel %vm1141, %v1207, %v1019
    %v1216 = vpack.c.bf16 %v1213, %v1213
    %v1217 = vpack.c.bf16 %v1139, %v1139
    %1219 = vrot.lane.b32.xlu0 %v1217, 32
    %v1220 = vpop.permute.xlu0 %1219
    %v1222 = vsel %vm338, %v1220, 0
    %1224 = vmatprep.subr.bf16.mxu0 0
    %1225 = vmatpush1.bf16.msra.mxu0 0
    %1226 = vmatprep.subr.bf16.mxu0 0
    %1227 = vmatpush1.bf16.msra.mxu0 0
    %1228 = vmatprep.subr.bf16.mxu0 0
    %1229 = vmatpush1.bf16.msra.mxu0 0
    %1230 = vmatprep.subr.bf16.mxu0 0
    %1231 = vmatpush1.bf16.msra.mxu0 0
    %1232 = vmatprep.subr.bf16.mxu0 0
    %1233 = vmatpush1.bf16.msra.mxu0 0
    %1234 = vmatprep.subr.bf16.mxu0 0
    %1235 = vmatpush1.bf16.msra.mxu0 0
    %1236 = vmatprep.subr.bf16.mxu0 0
    %1237 = vmatpush1.bf16.msra.mxu0 %v419
    %1238 = vmatprep.subr.bf16.mxu0 0
    %1239 = vmatpush1.bf16.msra.mxu0 %v418
    %1240 = vmatprep.subr.bf16.mxu0 0
    %1241 = vmatpush2.bf16.msra.mxu0 0
    %1242 = vmatprep.subr.bf16.mxu0 0
    %1243 = vmatpush2.bf16.msra.mxu0 0
    %1244 = vmatprep.subr.bf16.mxu0 0
    %1245 = vmatpush2.bf16.msra.mxu0 0
    %1246 = vmatprep.subr.bf16.mxu0 0
    %1247 = vmatpush2.bf16.msra.mxu0 0
    %1248 = vmatprep.subr.bf16.mxu0 0
    %1249 = vmatpush2.bf16.msra.mxu0 0
    %1250 = vmatprep.subr.bf16.mxu0 0
    %1251 = vmatpush2.bf16.msra.mxu0 0
    %1252 = vmatprep.subr.bf16.mxu0 0
    %1253 = vmatpush2.bf16.msra.mxu0 0
    %1254 = vmatprep.subr.bf16.mxu0 0
    %1255 = vmatpush2.bf16.msra.mxu0 0
    %1256 = vmatprep.mubr.bf16.mxu0 0
    %1257 = vmatmul.mubr.bf16.gmra.mxu0 %v1222
    %v1258 = vpop.f32.mrf.mxu0
    %v1259 = vadd.f32 0.0, %v1258
    %v1260 = vpop.f32.mrf.mxu0
    %v1261 = vpop.f32.mrf.mxu0
    %v1262 = vpop.f32.mrf.mxu0
    %1263 = vdwg.mxu0
    %1265 = vrot.lane.b32.xlu0 %v1216, 32
    %v1266 = vpop.permute.xlu0 %1265
    %v1268 = vsel %vm338, %v1266, 0
    %1270 = vmatprep.subr.bf16.mxu0 0
    %1271 = vmatpush1.bf16.msra.mxu0 0
    %1272 = vmatprep.subr.bf16.mxu0 0
    %1273 = vmatpush1.bf16.msra.mxu0 0
    %1274 = vmatprep.subr.bf16.mxu0 0
    %1275 = vmatpush1.bf16.msra.mxu0 0
    %1276 = vmatprep.subr.bf16.mxu0 0
    %1277 = vmatpush1.bf16.msra.mxu0 0
    %1278 = vmatprep.subr.bf16.mxu0 0
    %1279 = vmatpush1.bf16.msra.mxu0 0
    %1280 = vmatprep.subr.bf16.mxu0 0
    %1281 = vmatpush1.bf16.msra.mxu0 0
    %1282 = vmatprep.subr.bf16.mxu0 0
    %1283 = vmatpush1.bf16.msra.mxu0 %v474
    %1284 = vmatprep.subr.bf16.mxu0 0
    %1285 = vmatpush1.bf16.msra.mxu0 %v473
    %1286 = vmatprep.subr.bf16.mxu0 0
    %1287 = vmatpush2.bf16.msra.mxu0 0
    %1288 = vmatprep.subr.bf16.mxu0 0
    %1289 = vmatpush2.bf16.msra.mxu0 0
    %1290 = vmatprep.subr.bf16.mxu0 0
    %1291 = vmatpush2.bf16.msra.mxu0 0
    %1292 = vmatprep.subr.bf16.mxu0 0
    %1293 = vmatpush2.bf16.msra.mxu0 0
    %1294 = vmatprep.subr.bf16.mxu0 0
    %1295 = vmatpush2.bf16.msra.mxu0 0
    %1296 = vmatprep.subr.bf16.mxu0 0
    %1297 = vmatpush2.bf16.msra.mxu0 0
    %1298 = vmatprep.subr.bf16.mxu0 0
    %1299 = vmatpush2.bf16.msra.mxu0 0
    %1300 = vmatprep.subr.bf16.mxu0 0
    %1301 = vmatpush2.bf16.msra.mxu0 0
    %1302 = vmatprep.mubr.bf16.mxu0 0
    %1303 = vmatmul.mubr.bf16.gmra.mxu0 %v1268
    %v1304 = vpop.f32.mrf.mxu0
    %v1305 = vadd.f32 %v1259, %v1304
    %v1306 = vpop.f32.mrf.mxu0
    %v1307 = vpop.f32.mrf.mxu0
    %v1308 = vpop.f32.mrf.mxu0
    %1309 = vdwg.mxu0
    %v1310 = vadd.f32 %v1305, %v524
    %v1311 = vxor.u32 %v1310, 2147483648
    %v1312 = vmul.f32 %v1311, 1.442695
    %v1313 = vpow.pop %v1312
    %v1314 = vadd.f32 %v1313, 1.0
    %v1315 = vrcp.pop %v1314
    %v1316 = vmul.f32 1.0, %v1315
    %v1317 = vtanh.pop %v1310
    %v1318 = vmul.f32 %v1316, %v1140
    %1320 = vrot.lane.b32.xlu0 %v1317, 64
    %v1321 = vpop.permute.xlu0 %1320
    %v1323 = vmul.f32 %v1316, %v1321
    %1325 = vrot.lane.b32.xlu0 %v1323, 32
    %v1326 = vpop.permute.xlu0 %1325
    %v1328 = vadd.f32 %v1318, %v1326
    %v1329 = vtanh.pop %v1328
    %1331 = vrot.lane.b32.xlu0 %v1329, 64
    %v1332 = vpop.permute.xlu0 %1331
    %v1334 = vmul.f32 %v1316, %v1332
    %v1335 = vsel %vm1141, %v1334, %v1139
    %v1336 = vsel %vm1141, %v1328, %v1140
    %vm1337 = vcmp.gt.s32.totalorder %v324, 5
    %v1338 = vpack.c.bf16 %v1214, %v1214
    %1340 = vrot.lane.b32.xlu0 %v1338, 32
    %v1341 = vpop.permute.xlu0 %1340
    %v1343 = vsel %vm338, %v1341, 0
    %1345 = vmatprep.subr.bf16.mxu0 0
    %1346 = vmatpush1.bf16.msra.mxu0 0
    %1347 = vmatprep.subr.bf16.mxu0 0
    %1348 = vmatpush1.bf16.msra.mxu0 0
    %1349 = vmatprep.subr.bf16.mxu0 0
    %1350 = vmatpush1.bf16.msra.mxu0 0
    %1351 = vmatprep.subr.bf16.mxu0 0
    %1352 = vmatpush1.bf16.msra.mxu0 0
    %1353 = vmatprep.subr.bf16.mxu0 0
    %1354 = vmatpush1.bf16.msra.mxu0 0
    %1355 = vmatprep.subr.bf16.mxu0 0
    %1356 = vmatpush1.bf16.msra.mxu0 0
    %1357 = vmatprep.subr.bf16.mxu0 0
    %1358 = vmatpush1.bf16.msra.mxu0 %v335
    %1359 = vmatprep.subr.bf16.mxu0 0
    %1360 = vmatpush1.bf16.msra.mxu0 %v334
    %1361 = vmatprep.subr.bf16.mxu0 0
    %1362 = vmatpush2.bf16.msra.mxu0 0
    %1363 = vmatprep.subr.bf16.mxu0 0
    %1364 = vmatpush2.bf16.msra.mxu0 0
    %1365 = vmatprep.subr.bf16.mxu0 0
    %1366 = vmatpush2.bf16.msra.mxu0 0
    %1367 = vmatprep.subr.bf16.mxu0 0
    %1368 = vmatpush2.bf16.msra.mxu0 0
    %1369 = vmatprep.subr.bf16.mxu0 0
    %1370 = vmatpush2.bf16.msra.mxu0 0
    %1371 = vmatprep.subr.bf16.mxu0 0
    %1372 = vmatpush2.bf16.msra.mxu0 0
    %1373 = vmatprep.subr.bf16.mxu0 0
    %1374 = vmatpush2.bf16.msra.mxu0 0
    %1375 = vmatprep.subr.bf16.mxu0 0
    %1376 = vmatpush2.bf16.msra.mxu0 0
    %1377 = vmatprep.mubr.bf16.mxu0 0
    %1378 = vmatmul.mubr.bf16.gmra.mxu0 %v1343
    %v1379 = vpop.f32.mrf.mxu0
    %v1380 = vadd.f32 0.0, %v1379
    %v1381 = vpop.f32.mrf.mxu0
    %v1382 = vpop.f32.mrf.mxu0
    %v1383 = vpop.f32.mrf.mxu0
    %1384 = vdwg.mxu0
    %v1385 = vadd.f32 %v297, %v1380
    %v1386 = vxor.u32 %v1385, 2147483648
    %v1387 = vmul.f32 %v1386, 1.442695
    %v1388 = vpow.pop %v1387
    %v1389 = vadd.f32 %v1388, 1.0
    %v1390 = vrcp.pop %v1389
    %v1391 = vmul.f32 1.0, %v1390
    %v1392 = vtanh.pop %v1385
    %v1393 = vmul.f32 %v1391, %v1215
    %1395 = vrot.lane.b32.xlu0 %v1392, 64
    %v1396 = vpop.permute.xlu0 %1395
    %v1398 = vmul.f32 %v1391, %v1396
    %1400 = vrot.lane.b32.xlu0 %v1398, 32
    %v1401 = vpop.permute.xlu0 %1400
    %v1403 = vadd.f32 %v1393, %v1401
    %v1404 = vtanh.pop %v1403
    %1406 = vrot.lane.b32.xlu0 %v1404, 64
    %v1407 = vpop.permute.xlu0 %1406
    %v1409 = vmul.f32 %v1391, %v1407
    %v1410 = vsel %vm1337, %v1409, %v1214
    %v1411 = vsel %vm1337, %v1403, %v1215
    %v1412 = vpack.c.bf16 %v1409, %v1409
    %v1413 = vpack.c.bf16 %v1335, %v1335
    %1415 = vrot.lane.b32.xlu0 %v1413, 32
    %v1416 = vpop.permute.xlu0 %1415
    %v1418 = vsel %vm338, %v1416, 0
    %1420 = vmatprep.subr.bf16.mxu0 0
    %1421 = vmatpush1.bf16.msra.mxu0 0
    %1422 = vmatprep.subr.bf16.mxu0 0
    %1423 = vmatpush1.bf16.msra.mxu0 0
    %1424 = vmatprep.subr.bf16.mxu0 0
    %1425 = vmatpush1.bf16.msra.mxu0 0
    %1426 = vmatprep.subr.bf16.mxu0 0
    %1427 = vmatpush1.bf16.msra.mxu0 0
    %1428 = vmatprep.subr.bf16.mxu0 0
    %1429 = vmatpush1.bf16.msra.mxu0 0
    %1430 = vmatprep.subr.bf16.mxu0 0
    %1431 = vmatpush1.bf16.msra.mxu0 0
    %1432 = vmatprep.subr.bf16.mxu0 0
    %1433 = vmatpush1.bf16.msra.mxu0 %v419
    %1434 = vmatprep.subr.bf16.mxu0 0
    %1435 = vmatpush1.bf16.msra.mxu0 %v418
    %1436 = vmatprep.subr.bf16.mxu0 0
    %1437 = vmatpush2.bf16.msra.mxu0 0
    %1438 = vmatprep.subr.bf16.mxu0 0
    %1439 = vmatpush2.bf16.msra.mxu0 0
    %1440 = vmatprep.subr.bf16.mxu0 0
    %1441 = vmatpush2.bf16.msra.mxu0 0
    %1442 = vmatprep.subr.bf16.mxu0 0
    %1443 = vmatpush2.bf16.msra.mxu0 0
    %1444 = vmatprep.subr.bf16.mxu0 0
    %1445 = vmatpush2.bf16.msra.mxu0 0
    %1446 = vmatprep.subr.bf16.mxu0 0
    %1447 = vmatpush2.bf16.msra.mxu0 0
    %1448 = vmatprep.subr.bf16.mxu0 0
    %1449 = vmatpush2.bf16.msra.mxu0 0
    %1450 = vmatprep.subr.bf16.mxu0 0
    %1451 = vmatpush2.bf16.msra.mxu0 0
    %1452 = vmatprep.mubr.bf16.mxu0 0
    %1453 = vmatmul.mubr.bf16.gmra.mxu0 %v1418
    %v1454 = vpop.f32.mrf.mxu0
    %v1455 = vadd.f32 0.0, %v1454
    %v1456 = vpop.f32.mrf.mxu0
    %v1457 = vpop.f32.mrf.mxu0
    %v1458 = vpop.f32.mrf.mxu0
    %1459 = vdwg.mxu0
    %1461 = vrot.lane.b32.xlu0 %v1412, 32
    %v1462 = vpop.permute.xlu0 %1461
    %v1464 = vsel %vm338, %v1462, 0
    %1466 = vmatprep.subr.bf16.mxu0 0
    %1467 = vmatpush1.bf16.msra.mxu0 0
    %1468 = vmatprep.subr.bf16.mxu0 0
    %1469 = vmatpush1.bf16.msra.mxu0 0
    %1470 = vmatprep.subr.bf16.mxu0 0
    %1471 = vmatpush1.bf16.msra.mxu0 0
    %1472 = vmatprep.subr.bf16.mxu0 0
    %1473 = vmatpush1.bf16.msra.mxu0 0
    %1474 = vmatprep.subr.bf16.mxu0 0
    %1475 = vmatpush1.bf16.msra.mxu0 0
    %1476 = vmatprep.subr.bf16.mxu0 0
    %1477 = vmatpush1.bf16.msra.mxu0 0
    %1478 = vmatprep.subr.bf16.mxu0 0
    %1479 = vmatpush1.bf16.msra.mxu0 %v474
    %1480 = vmatprep.subr.bf16.mxu0 0
    %1481 = vmatpush1.bf16.msra.mxu0 %v473
    %1482 = vmatprep.subr.bf16.mxu0 0
    %1483 = vmatpush2.bf16.msra.mxu0 0
    %1484 = vmatprep.subr.bf16.mxu0 0
    %1485 = vmatpush2.bf16.msra.mxu0 0
    %1486 = vmatprep.subr.bf16.mxu0 0
    %1487 = vmatpush2.bf16.msra.mxu0 0
    %1488 = vmatprep.subr.bf16.mxu0 0
    %1489 = vmatpush2.bf16.msra.mxu0 0
    %1490 = vmatprep.subr.bf16.mxu0 0
    %1491 = vmatpush2.bf16.msra.mxu0 0
    %1492 = vmatprep.subr.bf16.mxu0 0
    %1493 = vmatpush2.bf16.msra.mxu0 0
    %1494 = vmatprep.subr.bf16.mxu0 0
    %1495 = vmatpush2.bf16.msra.mxu0 0
    %1496 = vmatprep.subr.bf16.mxu0 0
    %1497 = vmatpush2.bf16.msra.mxu0 0
    %1498 = vmatprep.mubr.bf16.mxu0 0
    %1499 = vmatmul.mubr.bf16.gmra.mxu0 %v1464
    %v1500 = vpop.f32.mrf.mxu0
    %v1501 = vadd.f32 %v1455, %v1500
    %v1502 = vpop.f32.mrf.mxu0
    %v1503 = vpop.f32.mrf.mxu0
    %v1504 = vpop.f32.mrf.mxu0
    %1505 = vdwg.mxu0
    %v1506 = vadd.f32 %v1501, %v524
    %v1507 = vxor.u32 %v1506, 2147483648
    %v1508 = vmul.f32 %v1507, 1.442695
    %v1509 = vpow.pop %v1508
    %v1510 = vadd.f32 %v1509, 1.0
    %v1511 = vrcp.pop %v1510
    %v1512 = vmul.f32 1.0, %v1511
    %v1513 = vtanh.pop %v1506
    %v1514 = vmul.f32 %v1512, %v1336
    %1516 = vrot.lane.b32.xlu0 %v1513, 64
    %v1517 = vpop.permute.xlu0 %1516
    %v1519 = vmul.f32 %v1512, %v1517
    %1521 = vrot.lane.b32.xlu0 %v1519, 32
    %v1522 = vpop.permute.xlu0 %1521
    %v1524 = vadd.f32 %v1514, %v1522
    %v1525 = vtanh.pop %v1524
    %1527 = vrot.lane.b32.xlu0 %v1525, 64
    %v1528 = vpop.permute.xlu0 %1527
    %v1530 = vmul.f32 %v1512, %v1528
    %v1531 = vsel %vm1337, %v1530, %v1335
    %v1532 = vsel %vm1337, %v1524, %v1336
    %vm1533 = vcmp.gt.s32.totalorder %v324, 6
    %v1534 = vpack.c.bf16 %v1410, %v1410
    %1536 = vrot.lane.b32.xlu0 %v1534, 32
    %v1537 = vpop.permute.xlu0 %1536
    %v1539 = vsel %vm338, %v1537, 0
    %1541 = vmatprep.subr.bf16.mxu0 0
    %1542 = vmatpush1.bf16.msra.mxu0 0
    %1543 = vmatprep.subr.bf16.mxu0 0
    %1544 = vmatpush1.bf16.msra.mxu0 0
    %1545 = vmatprep.subr.bf16.mxu0 0
    %1546 = vmatpush1.bf16.msra.mxu0 0
    %1547 = vmatprep.subr.bf16.mxu0 0
    %1548 = vmatpush1.bf16.msra.mxu0 0
    %1549 = vmatprep.subr.bf16.mxu0 0
    %1550 = vmatpush1.bf16.msra.mxu0 0
    %1551 = vmatprep.subr.bf16.mxu0 0
    %1552 = vmatpush1.bf16.msra.mxu0 0
    %1553 = vmatprep.subr.bf16.mxu0 0
    %1554 = vmatpush1.bf16.msra.mxu0 %v335
    %1555 = vmatprep.subr.bf16.mxu0 0
    %1556 = vmatpush1.bf16.msra.mxu0 %v334
    %1557 = vmatprep.subr.bf16.mxu0 0
    %1558 = vmatpush2.bf16.msra.mxu0 0
    %1559 = vmatprep.subr.bf16.mxu0 0
    %1560 = vmatpush2.bf16.msra.mxu0 0
    %1561 = vmatprep.subr.bf16.mxu0 0
    %1562 = vmatpush2.bf16.msra.mxu0 0
    %1563 = vmatprep.subr.bf16.mxu0 0
    %1564 = vmatpush2.bf16.msra.mxu0 0
    %1565 = vmatprep.subr.bf16.mxu0 0
    %1566 = vmatpush2.bf16.msra.mxu0 0
    %1567 = vmatprep.subr.bf16.mxu0 0
    %1568 = vmatpush2.bf16.msra.mxu0 0
    %1569 = vmatprep.subr.bf16.mxu0 0
    %1570 = vmatpush2.bf16.msra.mxu0 0
    %1571 = vmatprep.subr.bf16.mxu0 0
    %1572 = vmatpush2.bf16.msra.mxu0 0
    %1573 = vmatprep.mubr.bf16.mxu0 0
    %1574 = vmatmul.mubr.bf16.gmra.mxu0 %v1539
    %v1575 = vpop.f32.mrf.mxu0
    %v1576 = vadd.f32 0.0, %v1575
    %v1577 = vpop.f32.mrf.mxu0
    %v1578 = vpop.f32.mrf.mxu0
    %v1579 = vpop.f32.mrf.mxu0
    %1580 = vdwg.mxu0
    %v1581 = vadd.f32 %v302, %v1576
    %v1582 = vxor.u32 %v1581, 2147483648
    %v1583 = vmul.f32 %v1582, 1.442695
    %v1584 = vpow.pop %v1583
    %v1585 = vadd.f32 %v1584, 1.0
    %v1586 = vrcp.pop %v1585
    %v1587 = vmul.f32 1.0, %v1586
    %v1588 = vtanh.pop %v1581
    %v1589 = vmul.f32 %v1587, %v1411
    %1591 = vrot.lane.b32.xlu0 %v1588, 64
    %v1592 = vpop.permute.xlu0 %1591
    %v1594 = vmul.f32 %v1587, %v1592
    %1596 = vrot.lane.b32.xlu0 %v1594, 32
    %v1597 = vpop.permute.xlu0 %1596
    %v1599 = vadd.f32 %v1589, %v1597
    %v1600 = vtanh.pop %v1599
    %1602 = vrot.lane.b32.xlu0 %v1600, 64
    %v1603 = vpop.permute.xlu0 %1602
    %v1605 = vmul.f32 %v1587, %v1603
    %v1606 = vsel %vm1533, %v1605, %v1410
    %v1607 = vsel %vm1533, %v1599, %v1411
    %v1608 = vpack.c.bf16 %v1605, %v1605
    %v1609 = vpack.c.bf16 %v1531, %v1531
    %1611 = vrot.lane.b32.xlu0 %v1609, 32
    %v1612 = vpop.permute.xlu0 %1611
    %v1614 = vsel %vm338, %v1612, 0
    %1616 = vmatprep.subr.bf16.mxu0 0
    %1617 = vmatpush1.bf16.msra.mxu0 0
    %1618 = vmatprep.subr.bf16.mxu0 0
    %1619 = vmatpush1.bf16.msra.mxu0 0
    %1620 = vmatprep.subr.bf16.mxu0 0
    %1621 = vmatpush1.bf16.msra.mxu0 0
    %1622 = vmatprep.subr.bf16.mxu0 0
    %1623 = vmatpush1.bf16.msra.mxu0 0
    %1624 = vmatprep.subr.bf16.mxu0 0
    %1625 = vmatpush1.bf16.msra.mxu0 0
    %1626 = vmatprep.subr.bf16.mxu0 0
    %1627 = vmatpush1.bf16.msra.mxu0 0
    %1628 = vmatprep.subr.bf16.mxu0 0
    %1629 = vmatpush1.bf16.msra.mxu0 %v419
    %1630 = vmatprep.subr.bf16.mxu0 0
    %1631 = vmatpush1.bf16.msra.mxu0 %v418
    %1632 = vmatprep.subr.bf16.mxu0 0
    %1633 = vmatpush2.bf16.msra.mxu0 0
    %1634 = vmatprep.subr.bf16.mxu0 0
    %1635 = vmatpush2.bf16.msra.mxu0 0
    %1636 = vmatprep.subr.bf16.mxu0 0
    %1637 = vmatpush2.bf16.msra.mxu0 0
    %1638 = vmatprep.subr.bf16.mxu0 0
    %1639 = vmatpush2.bf16.msra.mxu0 0
    %1640 = vmatprep.subr.bf16.mxu0 0
    %1641 = vmatpush2.bf16.msra.mxu0 0
    %1642 = vmatprep.subr.bf16.mxu0 0
    %1643 = vmatpush2.bf16.msra.mxu0 0
    %1644 = vmatprep.subr.bf16.mxu0 0
    %1645 = vmatpush2.bf16.msra.mxu0 0
    %1646 = vmatprep.subr.bf16.mxu0 0
    %1647 = vmatpush2.bf16.msra.mxu0 0
    %1648 = vmatprep.mubr.bf16.mxu0 0
    %1649 = vmatmul.mubr.bf16.gmra.mxu0 %v1614
    %v1650 = vpop.f32.mrf.mxu0
    %v1651 = vadd.f32 0.0, %v1650
    %v1652 = vpop.f32.mrf.mxu0
    %v1653 = vpop.f32.mrf.mxu0
    %v1654 = vpop.f32.mrf.mxu0
    %1655 = vdwg.mxu0
    %1657 = vrot.lane.b32.xlu0 %v1608, 32
    %v1658 = vpop.permute.xlu0 %1657
    %v1660 = vsel %vm338, %v1658, 0
    %1662 = vmatprep.subr.bf16.mxu0 0
    %1663 = vmatpush1.bf16.msra.mxu0 0
    %1664 = vmatprep.subr.bf16.mxu0 0
    %1665 = vmatpush1.bf16.msra.mxu0 0
    %1666 = vmatprep.subr.bf16.mxu0 0
    %1667 = vmatpush1.bf16.msra.mxu0 0
    %1668 = vmatprep.subr.bf16.mxu0 0
    %1669 = vmatpush1.bf16.msra.mxu0 0
    %1670 = vmatprep.subr.bf16.mxu0 0
    %1671 = vmatpush1.bf16.msra.mxu0 0
    %1672 = vmatprep.subr.bf16.mxu0 0
    %1673 = vmatpush1.bf16.msra.mxu0 0
    %1674 = vmatprep.subr.bf16.mxu0 0
    %1675 = vmatpush1.bf16.msra.mxu0 %v474
    %1676 = vmatprep.subr.bf16.mxu0 0
    %1677 = vmatpush1.bf16.msra.mxu0 %v473
    %1678 = vmatprep.subr.bf16.mxu0 0
    %1679 = vmatpush2.bf16.msra.mxu0 0
    %1680 = vmatprep.subr.bf16.mxu0 0
    %1681 = vmatpush2.bf16.msra.mxu0 0
    %1682 = vmatprep.subr.bf16.mxu0 0
    %1683 = vmatpush2.bf16.msra.mxu0 0
    %1684 = vmatprep.subr.bf16.mxu0 0
    %1685 = vmatpush2.bf16.msra.mxu0 0
    %1686 = vmatprep.subr.bf16.mxu0 0
    %1687 = vmatpush2.bf16.msra.mxu0 0
    %1688 = vmatprep.subr.bf16.mxu0 0
    %1689 = vmatpush2.bf16.msra.mxu0 0
    %1690 = vmatprep.subr.bf16.mxu0 0
    %1691 = vmatpush2.bf16.msra.mxu0 0
    %1692 = vmatprep.subr.bf16.mxu0 0
    %1693 = vmatpush2.bf16.msra.mxu0 0
    %1694 = vmatprep.mubr.bf16.mxu0 0
    %1695 = vmatmul.mubr.bf16.gmra.mxu0 %v1660
    %v1696 = vpop.f32.mrf.mxu0
    %v1697 = vadd.f32 %v1651, %v1696
    %v1698 = vpop.f32.mrf.mxu0
    %v1699 = vpop.f32.mrf.mxu0
    %v1700 = vpop.f32.mrf.mxu0
    %1701 = vdwg.mxu0
    %v1702 = vadd.f32 %v1697, %v524
    %v1703 = vxor.u32 %v1702, 2147483648
    %v1704 = vmul.f32 %v1703, 1.442695
    %v1705 = vpow.pop %v1704
    %v1706 = vadd.f32 %v1705, 1.0
    %v1707 = vrcp.pop %v1706
    %v1708 = vmul.f32 1.0, %v1707
    %v1709 = vtanh.pop %v1702
    %v1710 = vmul.f32 %v1708, %v1532
    %1712 = vrot.lane.b32.xlu0 %v1709, 64
    %v1713 = vpop.permute.xlu0 %1712
    %v1715 = vmul.f32 %v1708, %v1713
    %1717 = vrot.lane.b32.xlu0 %v1715, 32
    %v1718 = vpop.permute.xlu0 %1717
    %v1720 = vadd.f32 %v1710, %v1718
    %v1721 = vtanh.pop %v1720
    %1723 = vrot.lane.b32.xlu0 %v1721, 64
    %v1724 = vpop.permute.xlu0 %1723
    %v1726 = vmul.f32 %v1708, %v1724
    %v1727 = vsel %vm1533, %v1726, %v1531
    %v1728 = vsel %vm1533, %v1720, %v1532
    %vm1729 = vcmp.gt.s32.totalorder %v324, 7
    %v1730 = vpack.c.bf16 %v1606, %v1606
    %1732 = vrot.lane.b32.xlu0 %v1730, 32
    %v1733 = vpop.permute.xlu0 %1732
    %v1735 = vsel %vm338, %v1733, 0
    %1737 = vmatprep.subr.bf16.mxu0 0
    %1738 = vmatpush1.bf16.msra.mxu0 0
    %1739 = vmatprep.subr.bf16.mxu0 0
    %1740 = vmatpush1.bf16.msra.mxu0 0
    %1741 = vmatprep.subr.bf16.mxu0 0
    %1742 = vmatpush1.bf16.msra.mxu0 0
    %1743 = vmatprep.subr.bf16.mxu0 0
    %1744 = vmatpush1.bf16.msra.mxu0 0
    %1745 = vmatprep.subr.bf16.mxu0 0
    %1746 = vmatpush1.bf16.msra.mxu0 0
    %1747 = vmatprep.subr.bf16.mxu0 0
    %1748 = vmatpush1.bf16.msra.mxu0 0
    %1749 = vmatprep.subr.bf16.mxu0 0
    %1750 = vmatpush1.bf16.msra.mxu0 %v335
    %1751 = vmatprep.subr.bf16.mxu0 0
    %1752 = vmatpush1.bf16.msra.mxu0 %v334
    %1753 = vmatprep.subr.bf16.mxu0 0
    %1754 = vmatpush2.bf16.msra.mxu0 0
    %1755 = vmatprep.subr.bf16.mxu0 0
    %1756 = vmatpush2.bf16.msra.mxu0 0
    %1757 = vmatprep.subr.bf16.mxu0 0
    %1758 = vmatpush2.bf16.msra.mxu0 0
    %1759 = vmatprep.subr.bf16.mxu0 0
    %1760 = vmatpush2.bf16.msra.mxu0 0
    %1761 = vmatprep.subr.bf16.mxu0 0
    %1762 = vmatpush2.bf16.msra.mxu0 0
    %1763 = vmatprep.subr.bf16.mxu0 0
    %1764 = vmatpush2.bf16.msra.mxu0 0
    %1765 = vmatprep.subr.bf16.mxu0 0
    %1766 = vmatpush2.bf16.msra.mxu0 0
    %1767 = vmatprep.subr.bf16.mxu0 0
    %1768 = vmatpush2.bf16.msra.mxu0 0
    %1769 = vmatprep.mubr.bf16.mxu0 0
    %1770 = vmatmul.mubr.bf16.gmra.mxu0 %v1735
    %v1771 = vpop.f32.mrf.mxu0
    %v1772 = vadd.f32 0.0, %v1771
    %v1773 = vpop.f32.mrf.mxu0
    %v1774 = vpop.f32.mrf.mxu0
    %v1775 = vpop.f32.mrf.mxu0
    %1776 = vdwg.mxu0
    %v1777 = vadd.f32 %v305, %v1772
    %v1778 = vxor.u32 %v1777, 2147483648
    %v1779 = vmul.f32 %v1778, 1.442695
    %v1780 = vpow.pop %v1779
    %v1781 = vadd.f32 %v1780, 1.0
    %v1782 = vrcp.pop %v1781
    %v1783 = vmul.f32 1.0, %v1782
    %v1784 = vtanh.pop %v1777
    %v1785 = vmul.f32 %v1783, %v1607
    %1787 = vrot.lane.b32.xlu0 %v1784, 64
    %v1788 = vpop.permute.xlu0 %1787
    %v1790 = vmul.f32 %v1783, %v1788
    %1792 = vrot.lane.b32.xlu0 %v1790, 32
    %v1793 = vpop.permute.xlu0 %1792
    %v1795 = vadd.f32 %v1785, %v1793
    %v1796 = vtanh.pop %v1795
    %1798 = vrot.lane.b32.xlu0 %v1796, 64
    %v1799 = vpop.permute.xlu0 %1798
    %v1801 = vmul.f32 %v1783, %v1799
    %v1802 = vpack.c.bf16 %v1801, %v1801
    %v1803 = vpack.c.bf16 %v1727, %v1727
    %1805 = vrot.lane.b32.xlu0 %v1803, 32
    %v1806 = vpop.permute.xlu0 %1805
    %v1808 = vsel %vm338, %v1806, 0
    %1810 = vmatprep.subr.bf16.mxu0 0
    %1811 = vmatpush1.bf16.msra.mxu0 0
    %1812 = vmatprep.subr.bf16.mxu0 0
    %1813 = vmatpush1.bf16.msra.mxu0 0
    %1814 = vmatprep.subr.bf16.mxu0 0
    %1815 = vmatpush1.bf16.msra.mxu0 0
    %1816 = vmatprep.subr.bf16.mxu0 0
    %1817 = vmatpush1.bf16.msra.mxu0 0
    %1818 = vmatprep.subr.bf16.mxu0 0
    %1819 = vmatpush1.bf16.msra.mxu0 0
    %1820 = vmatprep.subr.bf16.mxu0 0
    %1821 = vmatpush1.bf16.msra.mxu0 0
    %1822 = vmatprep.subr.bf16.mxu0 0
    %1823 = vmatpush1.bf16.msra.mxu0 %v419
    %1824 = vmatprep.subr.bf16.mxu0 0
    %1825 = vmatpush1.bf16.msra.mxu0 %v418
    %1826 = vmatprep.subr.bf16.mxu0 0
    %1827 = vmatpush2.bf16.msra.mxu0 0
    %1828 = vmatprep.subr.bf16.mxu0 0
    %1829 = vmatpush2.bf16.msra.mxu0 0
    %1830 = vmatprep.subr.bf16.mxu0 0
    %1831 = vmatpush2.bf16.msra.mxu0 0
    %1832 = vmatprep.subr.bf16.mxu0 0
    %1833 = vmatpush2.bf16.msra.mxu0 0
    %1834 = vmatprep.subr.bf16.mxu0 0
    %1835 = vmatpush2.bf16.msra.mxu0 0
    %1836 = vmatprep.subr.bf16.mxu0 0
    %1837 = vmatpush2.bf16.msra.mxu0 0
    %1838 = vmatprep.subr.bf16.mxu0 0
    %1839 = vmatpush2.bf16.msra.mxu0 0
    %1840 = vmatprep.subr.bf16.mxu0 0
    %1841 = vmatpush2.bf16.msra.mxu0 0
    %1842 = vmatprep.mubr.bf16.mxu0 0
    %1843 = vmatmul.mubr.bf16.gmra.mxu0 %v1808
    %v1844 = vpop.f32.mrf.mxu0
    %v1845 = vadd.f32 0.0, %v1844
    %v1846 = vpop.f32.mrf.mxu0
    %v1847 = vpop.f32.mrf.mxu0
    %v1848 = vpop.f32.mrf.mxu0
    %1849 = vdwg.mxu0
    %1851 = vrot.lane.b32.xlu0 %v1802, 32
    %v1852 = vpop.permute.xlu0 %1851
    %v1854 = vsel %vm338, %v1852, 0
    %1856 = vmatprep.subr.bf16.mxu0 0
    %1857 = vmatpush1.bf16.msra.mxu0 0
    %1858 = vmatprep.subr.bf16.mxu0 0
    %1859 = vmatpush1.bf16.msra.mxu0 0
    %1860 = vmatprep.subr.bf16.mxu0 0
    %1861 = vmatpush1.bf16.msra.mxu0 0
    %1862 = vmatprep.subr.bf16.mxu0 0
    %1863 = vmatpush1.bf16.msra.mxu0 0
    %1864 = vmatprep.subr.bf16.mxu0 0
    %1865 = vmatpush1.bf16.msra.mxu0 0
    %1866 = vmatprep.subr.bf16.mxu0 0
    %1867 = vmatpush1.bf16.msra.mxu0 0
    %1868 = vmatprep.subr.bf16.mxu0 0
    %1869 = vmatpush1.bf16.msra.mxu0 %v474
    %1870 = vmatprep.subr.bf16.mxu0 0
    %1871 = vmatpush1.bf16.msra.mxu0 %v473
    %1872 = vmatprep.subr.bf16.mxu0 0
    %1873 = vmatpush2.bf16.msra.mxu0 0
    %1874 = vmatprep.subr.bf16.mxu0 0
    %1875 = vmatpush2.bf16.msra.mxu0 0
    %1876 = vmatprep.subr.bf16.mxu0 0
    %1877 = vmatpush2.bf16.msra.mxu0 0
    %1878 = vmatprep.subr.bf16.mxu0 0
    %1879 = vmatpush2.bf16.msra.mxu0 0
    %1880 = vmatprep.subr.bf16.mxu0 0
    %1881 = vmatpush2.bf16.msra.mxu0 0
    %1882 = vmatprep.subr.bf16.mxu0 0
    %1883 = vmatpush2.bf16.msra.mxu0 0
    %1884 = vmatprep.subr.bf16.mxu0 0
    %1885 = vmatpush2.bf16.msra.mxu0 0
    %1886 = vmatprep.subr.bf16.mxu0 0
    %1887 = vmatpush2.bf16.msra.mxu0 0
    %1888 = vmatprep.mubr.bf16.mxu0 0
    %1889 = vmatmul.mubr.bf16.gmra.mxu0 %v1854
    %v1890 = vpop.f32.mrf.mxu0
    %v1891 = vadd.f32 %v1845, %v1890
    %v1892 = vpop.f32.mrf.mxu0
    %v1893 = vpop.f32.mrf.mxu0
    %v1894 = vpop.f32.mrf.mxu0
    %1895 = vdwg.mxu0
    %v1896 = vadd.f32 %v1891, %v524
    %v1897 = vxor.u32 %v1896, 2147483648
    %v1898 = vmul.f32 %v1897, 1.442695
    %v1899 = vpow.pop %v1898
    %v1900 = vadd.f32 %v1899, 1.0
    %v1901 = vrcp.pop %v1900
    %v1902 = vmul.f32 1.0, %v1901
    %v1903 = vtanh.pop %v1896
    %v1904 = vmul.f32 %v1902, %v1728
    %1906 = vrot.lane.b32.xlu0 %v1903, 64
    %v1907 = vpop.permute.xlu0 %1906
    %v1909 = vmul.f32 %v1902, %v1907
    %1911 = vrot.lane.b32.xlu0 %v1909, 32
    %v1912 = vpop.permute.xlu0 %1911
    %v1914 = vadd.f32 %v1904, %v1912
    %v1915 = vtanh.pop %v1914
    %1917 = vrot.lane.b32.xlu0 %v1915, 64
    %v1918 = vpop.permute.xlu0 %1917
    %v1920 = vmul.f32 %v1902, %v1918
    %v1921 = vsel %vm1729, %v1920, %v1727
    %1923 = vrot.lane.b32.xlu0 %v1921, 32
    %v1924 = vpop.permute.xlu0 %1923
    %1926 = vst.msk [vmem:[#allocation10] sm:$0xff] %vm338, %v1924
    // Predicated region
    $region58: #{tpu_custom_call.1} parent=1 // pred_check
      _
    $region59: #{tpu_custom_call.1} parent=1 // pred_check_branch
      %1928 = sbr.rel (0) target = $region61
    $region60: #{tpu_custom_call.1} parent=1 // pred_region
      %s1930 = ssub.s32 128, 128
      %1931 = vsyncadd [#allocation4], %s1930
      %s1933 = sshll.u32 [#allocation10], 4
      %s1934 = int_to_ptr.vmem [resolvable:$true] %s1933
      %1936 = dma.vmem_to_hbm [thread:$0]  %s1934, 128, %s10, [#allocation4]
    $region61: #{tpu_custom_call.1} parent=1 // pred_fallthru
      _
    // Predicated region
    $region62: #{tpu_custom_call.1} parent=1 // pred_check
      _
    $region63: #{tpu_custom_call.1} parent=1 // pred_check_branch
      %1938 = sbr.rel (0) target = $region65
    $region64: #{tpu_custom_call.1} parent=1 // pred_region
      %1939 = dma.done [#allocation4], 128
    $region65: #{tpu_custom_call.1} parent=1 // pred_fallthru
      _
    %1940 = vsyncpa [#allocation3], 1
    %1941 = vsyncpa [#allocation6], 1
    %1942 = vsyncpa [#allocation9], 1
    %1943 = vsyncpa [#allocation4], 1

</llo_original>
